<compile_context>
chip_gen: v7x
topology: tpu7x:2x2x1
jax: 0.10.0
libtpu: 0.0.40
codegen_flags: <defaults>
</compile_context>

<pallas_src>
import numpy as np
import jax
import jax.numpy as jnp
from jax.experimental import pallas as pl
from jax.experimental.pallas import tpu as pltpu


def _round_up(x, m):
    return (x + m - 1) // m * m


# ---------------------------------------------------------------------------
# Pallas kernel (transposed layout: batch along lanes)
#   leftT/rightT : (Kp, TB) bf16   pair-gathered FFM embeddings
#   linT         : (1,  TB) f32    FeaturesLinear sum + linear bias + out bias
#   w1T          : (H1, Kp) f32    BN0+BN1 folded into Linear1 (transposed)
#   b1           : (H1, 1)  f32
#   w2T          : (H2, H1) f32    BN2 folded into Linear2 (transposed)
#   b2           : (H2, 1)  f32
#   wo           : (H2, 1)  f32    output-layer weights
#   out          : (1,  TB) f32    sigmoid probabilities (lane-dense)
# ---------------------------------------------------------------------------
def fnfm_kernel(leftT_ref, rightT_ref, linT_ref,
                w1T_ref, b1_ref, w2T_ref, b2_ref, wo_ref,
                out_ref):
    # FFM cross term in f32 (bf16 inputs upcast once; no bf16 VPU math).
    cross = (leftT_ref[...].astype(jnp.float32) *
             rightT_ref[...].astype(jnp.float32))                    # (Kp, TB)

    # MLP layer 1 (BatchNorm0 + BatchNorm1 folded; dropout = identity).
    h1 = jnp.dot(w1T_ref[...], cross,
                 preferred_element_type=jnp.float32) + b1_ref[...]   # (H1, TB)
    h1 = jnp.maximum(h1, 0.0)

    # MLP layer 2 (BatchNorm2 folded).
    h2 = jnp.dot(w2T_ref[...], h1,
                 preferred_element_type=jnp.float32) + b2_ref[...]   # (H2, TB)
    h2 = jnp.maximum(h2, 0.0)

    # Output layer: sublane reduction -> naturally lane-dense (1, TB) row.
    logit = jnp.sum(h2 * wo_ref[...], axis=0, keepdims=True)         # (1, TB)

    # linT already holds: sum_f linear_w[x_f] + linear_bias + output_bias.
    out_ref[...] = jax.nn.sigmoid(logit + linT_ref[...])


def fnfm_forward_pallas(leftT, rightT, linT, params, *, tb=1024):
    """leftT/rightT: (Kp, B) bf16, linT: (1, B) f32.  Returns (B,) probs."""
    Kp, B = leftT.shape
    w1T, b1, w2T, b2, wo = params

    tb = max(128, _round_up(min(tb, B), 128))       # batch is the lane axis
    Bp = _round_up(B, tb)
    if Bp != B:                                     # fallback; callers pre-pad
        pad = Bp - B
        leftT = jnp.pad(leftT, ((0, 0), (0, pad)))
        rightT = jnp.pad(rightT, ((0, 0), (0, pad)))
        linT = jnp.pad(linT, ((0, 0), (0, pad)))

    def batched(rows):
        return pl.BlockSpec((rows, tb), lambda i: (0, i))

    def resident(a):
        # Constant block index -> stays VMEM-resident across all grid steps.
        return pl.BlockSpec(a.shape, lambda i: (0, 0))

    out = pl.pallas_call(
        fnfm_kernel,
        out_shape=jax.ShapeDtypeStruct((1, Bp), jnp.float32),
        grid=(Bp // tb,),
        in_specs=[batched(Kp), batched(Kp), batched(1),
                  resident(w1T), resident(b1),
                  resident(w2T), resident(b2), resident(wo)],
        out_specs=pl.BlockSpec((1, tb), lambda i: (0, i)),
        compiler_params=pltpu.CompilerParams(
            dimension_semantics=("parallel",),
            vmem_limit_bytes=48 * 1024 * 1024),
    )(leftT, rightT, linT, w1T, b1, w2T, b2, wo)
    return out[0, :B]


def bn_scale_shift(gamma, beta, mean, var, eps=1e-5):
    s = gamma / jnp.sqrt(var + eps)
    return s, beta - mean * s


if __name__ == "__main__":
    # ----------------------- model configuration -----------------------
    field_dims_orig = np.array(
        [5, 7, 3, 11, 4, 6, 8, 9, 2, 3, 5, 7, 4, 6, 8, 3, 2, 9, 5, 4, 6, 7, 3, 8, 2, 5, 6, 4],
        dtype=np.int32)
    field_dims = np.hstack((field_dims_orig[:3], field_dims_orig[4:8],
                            field_dims_orig[10:15], field_dims_orig[17:19],
                            field_dims_orig[21:24], field_dims_orig[26:]))
    F = len(field_dims)                       # 19 selected fields
    D = 4                                     # embed_dim
    H1, H2 = 64, 32                           # mlp_dims
    P = F * (F - 1) // 2                      # num field pairs (171)
    K = P * D                                 # ffm_output_dim = 684
    V = int(field_dims.sum())
    offsets = np.r_[0, np.cumsum(field_dims)[:-1]].astype(np.int32)
    B = 256                                   # small demo batch
    TB = 128                                  # demo tile -> 2-step grid; prod default 1024

    # ----------------------- deterministic params -----------------------
    key = jax.random.PRNGKey(0)
    ks = jax.random.split(key, 24)

    lin_w = jax.random.normal(ks[0], (V, 1), jnp.float32) * 0.05      # FeaturesLinear.fc
    lin_bias = jnp.float32(0.03)                                      # FeaturesLinear.bias
    ffm_emb = jax.random.normal(ks[1], (F, V, D), jnp.float32) * 0.05 # F embedding tables

    def rand_bn(kg, kb, km, kv, n):
        gamma = 1.0 + 0.1 * jax.random.normal(kg, (n,), jnp.float32)
        beta = 0.1 * jax.random.normal(kb, (n,), jnp.float32)
        mean = 0.1 * jax.random.normal(km, (n,), jnp.float32)
        var = jax.random.uniform(kv, (n,), jnp.float32, 0.5, 1.5)
        return gamma, beta, mean, var

    bn0 = rand_bn(ks[2], ks[3], ks[4], ks[5], K)
    w1 = jax.random.normal(ks[6], (K, H1), jnp.float32) * 0.05
    b1 = 0.01 * jax.random.normal(ks[7], (H1,), jnp.float32)
    bn1 = rand_bn(ks[8], ks[9], ks[10], ks[11], H1)
    w2 = jax.random.normal(ks[12], (H1, H2), jnp.float32) * 0.1
    b2 = 0.01 * jax.random.normal(ks[13], (H2,), jnp.float32)
    bn2 = rand_bn(ks[14], ks[15], ks[16], ks[17], H2)
    wo = jax.random.normal(ks[18], (H2, 1), jnp.float32) * 0.1
    bo = 0.01 * jax.random.normal(ks[19], (1,), jnp.float32)

    # ----------------------- example inputs -----------------------
    x = jax.random.randint(ks[20], (B, len(field_dims_orig)), 0,
                           jnp.asarray(field_dims_orig), dtype=jnp.int32)
    additional = jnp.zeros((B, 3), jnp.float32)   # unused by forward (signature parity)

    # --------- fold eval-mode BatchNorms into the adjacent Linears ---------
    s0, t0 = bn_scale_shift(*bn0)
    s1, t1 = bn_scale_shift(*bn1)
    s2, t2 = bn_scale_shift(*bn2)
    # BN0 before Linear1:  (x*s0 + t0) @ w1 + b1  ==  x @ (s0[:,None]*w1) + (t0 @ w1 + b1)
    # BN1 after Linear1:   BN(y)  ==  y*s1 + t1
    w1_eff = (s0[:, None] * w1) * s1[None, :]
    b1_eff = (t0 @ w1 + b1) * s1 + t1
    # BN2 after Linear2
    w2_eff = w2 * s2[None, :]
    b2_eff = b2 * s2 + t2

    # ----- pair indices; pad #pairs 171 -> 192 so Kp = 768 (6x128 lanes) ----
    i_np, j_np = np.triu_indices(F, k=1)          # torch nested i<j loop order
    Pp = _round_up(P, 32)                         # 192  -> Kp = Pp*D = 768
    n_fake = Pp - P
    i_pad = np.concatenate([i_np, np.zeros(n_fake)]).astype(np.int32)
    j_pad = np.concatenate([j_np, np.ones(n_fake)]).astype(np.int32)
    Kp = Pp * D

    # w1 rows reordered to the kernel's d-major / pair-padded K layout
    # (fake pairs get zero rows -> exact zero contribution).
    w1_pairpad = jnp.concatenate(
        [w1_eff.reshape(P, D, H1), jnp.zeros((n_fake, D, H1), jnp.float32)], axis=0)
    w1T = w1_pairpad.transpose(1, 0, 2).reshape(Kp, H1).T.astype(jnp.float32)  # (H1, Kp)

    params_k = (w1T,
                b1_eff.reshape(H1, 1).astype(jnp.float32),
                w2_eff.T.astype(jnp.float32),                  # (H2, H1)
                b2_eff.reshape(H2, 1).astype(jnp.float32),
                wo[:, 0].reshape(H2, 1).astype(jnp.float32))

    # bf16 embedding tables, feature-major -> XLA gather emits bf16 (Kp, B)
    # directly (gather + leading-dim reshape is a free bitcast, no relayout).
    emb_T = ffm_emb.astype(jnp.bfloat16).reshape(F * V, D).T   # (D, F*V) bf16
    i_idx = jnp.asarray(i_pad)
    j_idx = jnp.asarray(j_pad)
    offs = jnp.asarray(offsets)
    lin_w_col = lin_w[:, 0]
    # TODO(synk): fp8-e4m3 embedding stream (review item 7) skipped: ~3-6% per-
    # element error risks the 2e-3 tolerance and fp8 casts are v7x-only on MXU.

    @jax.jit
    def forward(x_raw):
        # Field selection (matches the torch cat of slices) + vocab offsets.
        x_sel = jnp.concatenate((x_raw[:, :3], x_raw[:, 4:8], x_raw[:, 10:15],
                                 x_raw[:, 17:19], x_raw[:, 21:24], x_raw[:, 26:]), axis=1)
        x_off = x_sel + offs[None, :]                          # (B, F)
        Bq = x_off.shape[0]
        tb = max(128, _round_up(min(TB, Bq), 128))
        Bp = _round_up(Bq, tb)
        if Bp != Bq:                                           # pad the tiny index
            x_off = jnp.pad(x_off, ((0, Bp - Bq), (0, 0)))     # tensor, not the big ones

        # FeaturesLinear pre-reduced; output-layer bias + linear bias folded in.
        lin = jnp.sum(lin_w_col[x_off], axis=1) + lin_bias + bo[0]
        linT = lin.reshape(1, Bp).astype(jnp.float32)          # lane-dense (1, Bp)

        # FFM pair gather straight into the kernel's (Kp, Bp) bf16 layout.
        # pair p=(i,j): left = xs[j][:, i] = emb_j[x_i], right = xs[i][:, j].
        left_idx = j_idx[:, None] * V + x_off[:, i_idx].T      # (Pp, Bp)
        right_idx = i_idx[:, None] * V + x_off[:, j_idx].T     # (Pp, Bp)
        leftT = jnp.take(emb_T, left_idx, axis=1).reshape(Kp, Bp)
        rightT = jnp.take(emb_T, right_idx, axis=1).reshape(Kp, Bp)

        out = fnfm_forward_pallas(leftT, rightT, linT, params_k, tb=tb)
        return out[:Bq]

    out = jax.block_until_ready(forward(x))

    # -------- pure-JAX f32 reference (PyTorch eval-mode semantics) --------
    x_sel_r = jnp.concatenate((x[:, :3], x[:, 4:8], x[:, 10:15],
                               x[:, 17:19], x[:, 21:24], x[:, 26:]), axis=1)
    x_off_r = x_sel_r + offs[None, :]
    emb_flat = ffm_emb.reshape(F * V, D)
    li = jnp.asarray(j_np)[None, :] * V + x_off_r[:, jnp.asarray(i_np)]
    ri = jnp.asarray(i_np)[None, :] * V + x_off_r[:, jnp.asarray(j_np)]
    left_f = jnp.take(emb_flat, li, axis=0).reshape(B, K)
    right_f = jnp.take(emb_flat, ri, axis=0).reshape(B, K)
    cross_ref = left_f * right_f
    h = cross_ref * s0[None, :] + t0[None, :]
    h1r = jnp.maximum((h @ w1 + b1[None, :]) * s1[None, :] + t1[None, :], 0.0)
    h2r = jnp.maximum((h1r @ w2 + b2[None, :]) * s2[None, :] + t2[None, :], 0.0)
    lin_sum = jnp.sum(lin_w[x_off_r, 0], axis=1)
    logit_ref = (h2r @ wo)[:, 0] + bo[0] + lin_sum + lin_bias
    ref = jax.nn.sigmoid(logit_ref)

    assert out.shape == (B,)
    assert bool(jnp.all(jnp.isfinite(out)))
    max_err = float(jnp.max(jnp.abs(out - ref)))
    assert max_err < 2e-3, f"max abs diff vs reference = {max_err}"
    print("KERNEL_OK")
</pallas_src>

<mosaic_0001>
module attributes {stable_mosaic.version = 11 : i64} {
  func.func @fnfm_kernel(%arg0: i32, %arg1: memref<768x128xbf16, #tpu.memory_space<vmem>>, %arg2: memref<768x128xbf16, #tpu.memory_space<vmem>>, %arg3: memref<1x128xf32, #tpu.memory_space<vmem>>, %arg4: memref<64x768xf32, #tpu.memory_space<vmem>>, %arg5: memref<64x1xf32, #tpu.memory_space<vmem>>, %arg6: memref<32x64xf32, #tpu.memory_space<vmem>>, %arg7: memref<32x1xf32, #tpu.memory_space<vmem>>, %arg8: memref<32x1xf32, #tpu.memory_space<vmem>>, %arg9: memref<1x128xf32, #tpu.memory_space<vmem>>) attributes {dimension_semantics = [#tpu.dimension_semantics<parallel>], iteration_bounds = array<i64: 2>, scalar_prefetch = 0 : i64, scratch_operands = 0 : i64, tpu.core_type = #tpu.core_type<tc>, window_params = [{transform_indices = @transform_0, window_bounds = array<i64: 768, 128>}, {transform_indices = @transform_1, window_bounds = array<i64: 768, 128>}, {transform_indices = @transform_2, window_bounds = array<i64: 1, 128>}, {pipeline_mode = #tpu.pipeline_mode<synchronous>, transform_indices = @transform_3, window_bounds = array<i64: 64, 768>}, {pipeline_mode = #tpu.pipeline_mode<synchronous>, transform_indices = @transform_4, window_bounds = array<i64: 64, 1>}, {pipeline_mode = #tpu.pipeline_mode<synchronous>, transform_indices = @transform_5, window_bounds = array<i64: 32, 64>}, {pipeline_mode = #tpu.pipeline_mode<synchronous>, transform_indices = @transform_6, window_bounds = array<i64: 32, 1>}, {pipeline_mode = #tpu.pipeline_mode<synchronous>, transform_indices = @transform_7, window_bounds = array<i64: 32, 1>}, {transform_indices = @transform_8, window_bounds = array<i64: 1, 128>}]} {
    %c0 = arith.constant 0 : index
    %c0_0 = arith.constant 0 : index
    %0 = vector.load %arg1[%c0, %c0_0] : memref<768x128xbf16, #tpu.memory_space<vmem>>, vector<768x128xbf16>
    %1 = arith.extf %0 : vector<768x128xbf16> to vector<768x128xf32>
    %c0_1 = arith.constant 0 : index
    %c0_2 = arith.constant 0 : index
    %2 = vector.load %arg2[%c0_1, %c0_2] : memref<768x128xbf16, #tpu.memory_space<vmem>>, vector<768x128xbf16>
    %3 = arith.extf %2 : vector<768x128xbf16> to vector<768x128xf32>
    %4 = arith.mulf %1, %3 : vector<768x128xf32>
    %c0_3 = arith.constant 0 : index
    %c0_4 = arith.constant 0 : index
    %5 = vector.load %arg4[%c0_3, %c0_4] : memref<64x768xf32, #tpu.memory_space<vmem>>, vector<64x768xf32>
    %cst = arith.constant dense<0.000000e+00> : vector<64x128xf32>
    %6 = tpu.matmul %5, %4, %cst {dimension_numbers = #tpu.dot_dimension_numbers<[1], [0], [0], [1], [0, 0, 1, 1], [], []>} : vector<64x768xf32>, vector<768x128xf32>, vector<64x128xf32> -> vector<64x128xf32>
    %c0_5 = arith.constant 0 : index
    %c0_6 = arith.constant 0 : index
    %7 = vector.load %arg5[%c0_5, %c0_6] : memref<64x1xf32, #tpu.memory_space<vmem>>, vector<64x1xf32>
    %8 = vector.broadcast %7 : vector<64x1xf32> to vector<64x128xf32>
    %9 = arith.addf %6, %8 : vector<64x128xf32>
    %cst_7 = arith.constant 0.000000e+00 : f32
    %10 = vector.broadcast %cst_7 : f32 to vector<64x128xf32>
    %11 = arith.maximumf %9, %10 : vector<64x128xf32>
    %c0_8 = arith.constant 0 : index
    %c0_9 = arith.constant 0 : index
    %12 = vector.load %arg6[%c0_8, %c0_9] : memref<32x64xf32, #tpu.memory_space<vmem>>, vector<32x64xf32>
    %cst_10 = arith.constant dense<0.000000e+00> : vector<32x128xf32>
    %13 = tpu.matmul %12, %11, %cst_10 {dimension_numbers = #tpu.dot_dimension_numbers<[1], [0], [0], [1], [0, 0, 1, 1], [], []>} : vector<32x64xf32>, vector<64x128xf32>, vector<32x128xf32> -> vector<32x128xf32>
    %c0_11 = arith.constant 0 : index
    %c0_12 = arith.constant 0 : index
    %14 = vector.load %arg7[%c0_11, %c0_12] : memref<32x1xf32, #tpu.memory_space<vmem>>, vector<32x1xf32>
    %15 = vector.broadcast %14 : vector<32x1xf32> to vector<32x128xf32>
    %16 = arith.addf %13, %15 : vector<32x128xf32>
    %cst_13 = arith.constant 0.000000e+00 : f32
    %17 = vector.broadcast %cst_13 : f32 to vector<32x128xf32>
    %18 = arith.maximumf %16, %17 : vector<32x128xf32>
    %c0_14 = arith.constant 0 : index
    %c0_15 = arith.constant 0 : index
    %19 = vector.load %arg8[%c0_14, %c0_15] : memref<32x1xf32, #tpu.memory_space<vmem>>, vector<32x1xf32>
    %20 = vector.broadcast %19 : vector<32x1xf32> to vector<32x128xf32>
    %21 = arith.mulf %18, %20 : vector<32x128xf32>
    %cst_16 = arith.constant dense<0.000000e+00> : vector<128xf32>
    %22 = vector.multi_reduction <add>, %21, %cst_16 [0] : vector<32x128xf32> to vector<128xf32>
    %23 = vector.shape_cast %22 : vector<128xf32> to vector<1x128xf32>
    %c0_17 = arith.constant 0 : index
    %c0_18 = arith.constant 0 : index
    %24 = vector.load %arg3[%c0_17, %c0_18] : memref<1x128xf32, #tpu.memory_space<vmem>>, vector<1x128xf32>
    %25 = arith.addf %23, %24 : vector<1x128xf32>
    %26 = arith.negf %25 : vector<1x128xf32>
    %27 = math.exp %26 : vector<1x128xf32>
    %cst_19 = arith.constant 1.000000e+00 : f32
    %28 = vector.broadcast %cst_19 : f32 to vector<1x128xf32>
    %29 = arith.addf %28, %27 : vector<1x128xf32>
    %30 = arith.divf %28, %29 : vector<1x128xf32>
    %c0_20 = arith.constant 0 : index
    %c0_21 = arith.constant 0 : index
    %31 = vector.load %arg9[%c0_20, %c0_21] : memref<1x128xf32, #tpu.memory_space<vmem>>, vector<1x128xf32>
    tpu.vector_store %arg9[%c0_20, %c0_21], %30 {strides = array<i32>} : memref<1x128xf32, #tpu.memory_space<vmem>>, vector<1x128xf32>,
    return
  }
  func.func @transform_0(%arg0: i32) -> (i32, i32) {
    %c0_i32 = arith.constant 0 : i32
    %c0_i32_0 = arith.constant 0 : i32
    return %c0_i32, %arg0 : i32, i32
  }
  func.func @transform_1(%arg0: i32) -> (i32, i32) {
    %c0_i32 = arith.constant 0 : i32
    %c0_i32_0 = arith.constant 0 : i32
    return %c0_i32, %arg0 : i32, i32
  }
  func.func @transform_2(%arg0: i32) -> (i32, i32) {
    %c0_i32 = arith.constant 0 : i32
    %c0_i32_0 = arith.constant 0 : i32
    return %c0_i32, %arg0 : i32, i32
  }
  func.func @transform_3(%arg0: i32) -> (i32, i32) {
    %c0_i32 = arith.constant 0 : i32
    %c0_i32_0 = arith.constant 0 : i32
    %c0_i32_1 = arith.constant 0 : i32
    return %c0_i32, %c0_i32_0 : i32, i32
  }
  func.func @transform_4(%arg0: i32) -> (i32, i32) {
    %c0_i32 = arith.constant 0 : i32
    %c0_i32_0 = arith.constant 0 : i32
    %c0_i32_1 = arith.constant 0 : i32
    return %c0_i32, %c0_i32_0 : i32, i32
  }
  func.func @transform_5(%arg0: i32) -> (i32, i32) {
    %c0_i32 = arith.constant 0 : i32
    %c0_i32_0 = arith.constant 0 : i32
    %c0_i32_1 = arith.constant 0 : i32
    return %c0_i32, %c0_i32_0 : i32, i32
  }
  func.func @transform_6(%arg0: i32) -> (i32, i32) {
    %c0_i32 = arith.constant 0 : i32
    %c0_i32_0 = arith.constant 0 : i32
    %c0_i32_1 = arith.constant 0 : i32
    return %c0_i32, %c0_i32_0 : i32, i32
  }
  func.func @transform_7(%arg0: i32) -> (i32, i32) {
    %c0_i32 = arith.constant 0 : i32
    %c0_i32_0 = arith.constant 0 : i32
    %c0_i32_1 = arith.constant 0 : i32
    return %c0_i32, %c0_i32_0 : i32, i32
  }
  func.func @transform_8(%arg0: i32) -> (i32, i32) {
    %c0_i32 = arith.constant 0 : i32
    %c0_i32_0 = arith.constant 0 : i32
    return %c0_i32, %arg0 : i32, i32
  }
}

</mosaic_0001>

<llo_original>
// kernel: forward.1
$region0: #{forward.1}
  #allocation0 [shape = 'u32[]', space=smem, size = 0x4, offset = 0x4, fixed_abs, tag = 'smem constant byte address 0x4 - core index']
  #allocation1 [shape = 'u32[144,128]{1,0:T(1,128)}', space=vmem, size = 0x12000, scoped, tag = 'internal scratch']
  %s0 = inlined_call_operand.vmem [shape: bf16[768,256], index: 0, kind: input, shape index: {}]
  %s1 = inlined_call_operand.vmem [shape: bf16[768,256], index: 1, kind: input, shape index: {}]
  %s2 = inlined_call_operand.vmem [shape: f32[1,256], index: 2, kind: input, shape index: {}]
  %s3 = inlined_call_operand.vmem [shape: f32[64,768], index: 3, kind: input, shape index: {}]
  %s4 = inlined_call_operand.vmem [shape: f32[64,1], index: 4, kind: input, shape index: {}]
  %s5 = inlined_call_operand.vmem [shape: f32[32,64], index: 5, kind: input, shape index: {}]
  %s6 = inlined_call_operand.vmem [shape: f32[32,1], index: 6, kind: input, shape index: {}]
  %s7 = inlined_call_operand.vmem [shape: f32[32,1], index: 7, kind: input, shape index: {}]
  %s8 = inlined_call_operand.hbm [shape: f32[1,256], index: 8, kind: output, shape index: {}]
  %s9 = sld [smem:[#allocation0]]
  $region147: #{forward.1} parent=0
    _
  %s11 = ssub.s32 1, %s9
  %s12 = scalar_select 0, %s11, %s9
  $region1: #{forward.1} parent=0
    #allocation2 [shape = 'u8[393216]{0}', space=vmem, size = 0x60000, scoped, tag = 'input window, operand 0']
    #allocation3 [shape = 'u8[393216]{0}', space=vmem, size = 0x60000, scoped, tag = 'input window, operand 1']
    #allocation4 [shape = 'u8[1024]{0}', space=vmem, size = 0x400, scoped, tag = 'output window, operand 0']
    #allocation5 [shape = 's32[2]{0}', space=sflag, size = 0x8, scoped, tag = 'scoped memory for forward.1']
    %13 = vsyncpa [#allocation5], 0
    %s14 = scalar_lea.sflag [#allocation5], 1
    %15 = vsyncpa %s14, 0
    loop: start=0, step=1, limit=4
    $region2: #{forward.1} parent=1 // loop_pre_header
      _
    $region3: #{forward.1} parent=1 // loop_header
      %s17 = sphi 0, %s21
      %p18 = scmp.ge.s32.totalorder %s17, 4
      %s27 = sphi 0, %s29
      %s30 = sphi 0, %s27
      %s31 = sphi 0, %s30
      %s47 = sphi 0, %s31
      %s53 = sphi 0, %s55
      %s56 = sphi 0, %s53
      %s57 = sphi 0, %s56
      %s73 = sphi 0, %s57
      %s79 = sphi 0, %s81
      %s82 = sphi 0, %s79
      %s83 = sphi 0, %s82
      %s99 = sphi 0, %s83
      %s103 = sphi 0, %s103
      %s105 = sphi 0, %s103
      %s106 = sphi 0, %s105
      %s120 = sphi 0, %s106
      %s124 = sphi 0, %s124
      %s126 = sphi 0, %s124
      %s127 = sphi 0, %s126
      %s141 = sphi 0, %s127
      %s145 = sphi 0, %s145
      %s147 = sphi 0, %s145
      %s148 = sphi 0, %s147
      %s162 = sphi 0, %s148
      %s166 = sphi 0, %s166
      %s168 = sphi 0, %s166
      %s169 = sphi 0, %s168
      %s183 = sphi 0, %s169
      %s187 = sphi 0, %s187
      %s189 = sphi 0, %s187
      %s190 = sphi 0, %s189
      %s204 = sphi 0, %s190
      %s210 = sphi 0, %s212
      %s213 = sphi 0, %s210
      %s214 = sphi 0, %s213
      %s230 = sphi 0, %s214
    $region4: #{forward.1} parent=1 // loop_header_branch
      %20 = sbr.rel (%p18) target = $region8
    $region5: #{forward.1} parent=1 // loop_body
      %s22 = ssub.s32 %s17, 1
      %s23 = ssub.s32 %s17, 2
      %s24 = sadd.s32 %s17, 1
      %s25 = ssub.s32 %s17, %s24
      %p26 = scmp.eq.s32.totalorder %s25, 0
      %s28 = sadd.s32 %s27, 1
      %s29 = scalar_select %p26, %s27, %s28
      %p32 = pneg %p26
      %p33 = scmp.eq.s32.totalorder %s17, 1
      %p34 = por %p32, %p33
      %p35 = scmp.ne.s32.totalorder %s27, %s30
      %p36 = scmp.eq.s32.totalorder %s17, 0
      %p37 = por %p35, %p36
      %p38 = scmp.ne.s32.totalorder %s27, %s30
      %p39 = scmp.eq.s32.totalorder %s22, 1
      %p40 = por %p38, %p39
      %p41 = scmp.ne.s32.totalorder %s30, %s31
      %p42 = scmp.eq.s32.totalorder %s22, 0
      %p43 = por %p41, %p42
      %p44 = scmp.ne.s32.totalorder %s30, %s31
      %p45 = scmp.eq.s32.totalorder %s23, 1
      %p46 = por %p44, %p45
      %p48 = scmp.ne.s32.totalorder %s31, %s47
      %p49 = scmp.eq.s32.totalorder %s23, 0
      %p50 = por %p48, %p49
      %s51 = ssub.s32 %s17, %s24
      %p52 = scmp.eq.s32.totalorder %s51, 0
      %s54 = sadd.s32 %s53, 1
      %s55 = scalar_select %p52, %s53, %s54
      %p58 = pneg %p52
      %p59 = scmp.eq.s32.totalorder %s17, 1
      %p60 = por %p58, %p59
      %p61 = scmp.ne.s32.totalorder %s53, %s56
      %p62 = scmp.eq.s32.totalorder %s17, 0
      %p63 = por %p61, %p62
      %p64 = scmp.ne.s32.totalorder %s53, %s56
      %p65 = scmp.eq.s32.totalorder %s22, 1
      %p66 = por %p64, %p65
      %p67 = scmp.ne.s32.totalorder %s56, %s57
      %p68 = scmp.eq.s32.totalorder %s22, 0
      %p69 = por %p67, %p68
      %p70 = scmp.ne.s32.totalorder %s56, %s57
      %p71 = scmp.eq.s32.totalorder %s23, 1
      %p72 = por %p70, %p71
      %p74 = scmp.ne.s32.totalorder %s57, %s73
      %p75 = scmp.eq.s32.totalorder %s23, 0
      %p76 = por %p74, %p75
      %s77 = ssub.s32 %s17, %s24
      %p78 = scmp.eq.s32.totalorder %s77, 0
      %s80 = sadd.s32 %s79, 1
      %s81 = scalar_select %p78, %s79, %s80
      %p84 = pneg %p78
      %p85 = scmp.eq.s32.totalorder %s17, 1
      %p86 = por %p84, %p85
      %p87 = scmp.ne.s32.totalorder %s79, %s82
      %p88 = scmp.eq.s32.totalorder %s17, 0
      %p89 = por %p87, %p88
      %p90 = scmp.ne.s32.totalorder %s79, %s82
      %p91 = scmp.eq.s32.totalorder %s22, 1
      %p92 = por %p90, %p91
      %p93 = scmp.ne.s32.totalorder %s82, %s83
      %p94 = scmp.eq.s32.totalorder %s22, 0
      %p95 = por %p93, %p94
      %p96 = scmp.ne.s32.totalorder %s82, %s83
      %p97 = scmp.eq.s32.totalorder %s23, 1
      %p98 = por %p96, %p97
      %p100 = scmp.ne.s32.totalorder %s83, %s99
      %p101 = scmp.eq.s32.totalorder %s23, 0
      %p102 = por %p100, %p101
      %s104 = sadd.s32 %s103, 1
      %p107 = scmp.eq.s32.totalorder %s17, 1
      %p108 = scmp.ne.s32.totalorder %s103, %s105
      %p109 = scmp.eq.s32.totalorder %s17, 0
      %p110 = por %p108, %p109
      %p111 = scmp.ne.s32.totalorder %s103, %s105
      %p112 = scmp.eq.s32.totalorder %s22, 1
      %p113 = por %p111, %p112
      %p114 = scmp.ne.s32.totalorder %s105, %s106
      %p115 = scmp.eq.s32.totalorder %s22, 0
      %p116 = por %p114, %p115
      %p117 = scmp.ne.s32.totalorder %s105, %s106
      %p118 = scmp.eq.s32.totalorder %s23, 1
      %p119 = por %p117, %p118
      %p121 = scmp.ne.s32.totalorder %s106, %s120
      %p122 = scmp.eq.s32.totalorder %s23, 0
      %p123 = por %p121, %p122
      %s125 = sadd.s32 %s124, 1
      %p128 = scmp.eq.s32.totalorder %s17, 1
      %p129 = scmp.ne.s32.totalorder %s124, %s126
      %p130 = scmp.eq.s32.totalorder %s17, 0
      %p131 = por %p129, %p130
      %p132 = scmp.ne.s32.totalorder %s124, %s126
      %p133 = scmp.eq.s32.totalorder %s22, 1
      %p134 = por %p132, %p133
      %p135 = scmp.ne.s32.totalorder %s126, %s127
      %p136 = scmp.eq.s32.totalorder %s22, 0
      %p137 = por %p135, %p136
      %p138 = scmp.ne.s32.totalorder %s126, %s127
      %p139 = scmp.eq.s32.totalorder %s23, 1
      %p140 = por %p138, %p139
      %p142 = scmp.ne.s32.totalorder %s127, %s141
      %p143 = scmp.eq.s32.totalorder %s23, 0
      %p144 = por %p142, %p143
      %s146 = sadd.s32 %s145, 1
      %p149 = scmp.eq.s32.totalorder %s17, 1
      %p150 = scmp.ne.s32.totalorder %s145, %s147
      %p151 = scmp.eq.s32.totalorder %s17, 0
      %p152 = por %p150, %p151
      %p153 = scmp.ne.s32.totalorder %s145, %s147
      %p154 = scmp.eq.s32.totalorder %s22, 1
      %p155 = por %p153, %p154
      %p156 = scmp.ne.s32.totalorder %s147, %s148
      %p157 = scmp.eq.s32.totalorder %s22, 0
      %p158 = por %p156, %p157
      %p159 = scmp.ne.s32.totalorder %s147, %s148
      %p160 = scmp.eq.s32.totalorder %s23, 1
      %p161 = por %p159, %p160
      %p163 = scmp.ne.s32.totalorder %s148, %s162
      %p164 = scmp.eq.s32.totalorder %s23, 0
      %p165 = por %p163, %p164
      %s167 = sadd.s32 %s166, 1
      %p170 = scmp.eq.s32.totalorder %s17, 1
      %p171 = scmp.ne.s32.totalorder %s166, %s168
      %p172 = scmp.eq.s32.totalorder %s17, 0
      %p173 = por %p171, %p172
      %p174 = scmp.ne.s32.totalorder %s166, %s168
      %p175 = scmp.eq.s32.totalorder %s22, 1
      %p176 = por %p174, %p175
      %p177 = scmp.ne.s32.totalorder %s168, %s169
      %p178 = scmp.eq.s32.totalorder %s22, 0
      %p179 = por %p177, %p178
      %p180 = scmp.ne.s32.totalorder %s168, %s169
      %p181 = scmp.eq.s32.totalorder %s23, 1
      %p182 = por %p180, %p181
      %p184 = scmp.ne.s32.totalorder %s169, %s183
      %p185 = scmp.eq.s32.totalorder %s23, 0
      %p186 = por %p184, %p185
      %s188 = sadd.s32 %s187, 1
      %p191 = scmp.eq.s32.totalorder %s17, 1
      %p192 = scmp.ne.s32.totalorder %s187, %s189
      %p193 = scmp.eq.s32.totalorder %s17, 0
      %p194 = por %p192, %p193
      %p195 = scmp.ne.s32.totalorder %s187, %s189
      %p196 = scmp.eq.s32.totalorder %s22, 1
      %p197 = por %p195, %p196
      %p198 = scmp.ne.s32.totalorder %s189, %s190
      %p199 = scmp.eq.s32.totalorder %s22, 0
      %p200 = por %p198, %p199
      %p201 = scmp.ne.s32.totalorder %s189, %s190
      %p202 = scmp.eq.s32.totalorder %s23, 1
      %p203 = por %p201, %p202
      %p205 = scmp.ne.s32.totalorder %s190, %s204
      %p206 = scmp.eq.s32.totalorder %s23, 0
      %p207 = por %p205, %p206
      %s208 = ssub.s32 %s17, %s24
      %p209 = scmp.eq.s32.totalorder %s208, 0
      %s211 = sadd.s32 %s210, 1
      %s212 = scalar_select %p209, %s210, %s211
      %p215 = pneg %p209
      %p216 = scmp.eq.s32.totalorder %s17, 1
      %p217 = por %p215, %p216
      %p218 = scmp.ne.s32.totalorder %s210, %s213
      %p219 = scmp.eq.s32.totalorder %s17, 0
      %p220 = por %p218, %p219
      %p221 = scmp.ne.s32.totalorder %s210, %s213
      %p222 = scmp.eq.s32.totalorder %s22, 1
      %p223 = por %p221, %p222
      %p224 = scmp.ne.s32.totalorder %s213, %s214
      %p225 = scmp.eq.s32.totalorder %s22, 0
      %p226 = por %p224, %p225
      %p227 = scmp.ne.s32.totalorder %s213, %s214
      %p228 = scmp.eq.s32.totalorder %s23, 1
      %p229 = por %p227, %p228
      %p231 = scmp.ne.s32.totalorder %s214, %s230
      %p232 = scmp.eq.s32.totalorder %s23, 0
      %p233 = por %p231, %p232
      %p234 = scmp.le.s32.totalorder 1, %s17
      %p235 = scmp.lt.s32.totalorder %s17, 3
      %p236 = pnand %p234, %p235
      %p237 = pneg %p236
      // Predicated region
      $region9: #{forward.1} parent=5 // pred_check
        _
      $region10: #{forward.1} parent=5 // pred_check_branch
        %239 = sbr.rel (%p236) target = $region12
      $region11: #{forward.1} parent=5 // pred_region
        %s240 = ssub.s32 %s17, 1
        // Predicated region
        $region13: #{forward.1} parent=11 // pred_check
          %p241 = pneg %p116
        $region14: #{forward.1} parent=11 // pred_check_branch
          %243 = sbr.rel (%p241) target = $region16
        $region15: #{forward.1} parent=11 // pred_region
          _
        $region16: #{forward.1} parent=11 // pred_fallthru
          _
        // Predicated region
        $region17: #{forward.1} parent=11 // pred_check
          %p244 = pneg %p137
        $region18: #{forward.1} parent=11 // pred_check_branch
          %246 = sbr.rel (%p244) target = $region20
        $region19: #{forward.1} parent=11 // pred_region
          _
        $region20: #{forward.1} parent=11 // pred_fallthru
          _
        // Predicated region
        $region21: #{forward.1} parent=11 // pred_check
          %p247 = pneg %p158
        $region22: #{forward.1} parent=11 // pred_check_branch
          %249 = sbr.rel (%p247) target = $region24
        $region23: #{forward.1} parent=11 // pred_region
          _
        $region24: #{forward.1} parent=11 // pred_fallthru
          _
        // Predicated region
        $region25: #{forward.1} parent=11 // pred_check
          %p250 = pneg %p179
        $region26: #{forward.1} parent=11 // pred_check_branch
          %252 = sbr.rel (%p250) target = $region28
        $region27: #{forward.1} parent=11 // pred_region
          _
        $region28: #{forward.1} parent=11 // pred_fallthru
          _
        // Predicated region
        $region29: #{forward.1} parent=11 // pred_check
          %p253 = pneg %p200
        $region30: #{forward.1} parent=11 // pred_check_branch
          %255 = sbr.rel (%p253) target = $region32
        $region31: #{forward.1} parent=11 // pred_region
          _
        $region32: #{forward.1} parent=11 // pred_fallthru
          _
      $region12: #{forward.1} parent=5 // pred_fallthru
        _
      %p256 = scmp.lt.s32.totalorder %s17, 2
      // Predicated region
      $region33: #{forward.1} parent=5 // pred_check
        %p257 = pneg %p256
      $region34: #{forward.1} parent=5 // pred_check_branch
        %259 = sbr.rel (%p257) target = $region36
      $region35: #{forward.1} parent=5 // pred_region
        // Predicated region
        $region37: #{forward.1} parent=35 // pred_check
          %p260 = pneg %p37
        $region38: #{forward.1} parent=35 // pred_check_branch
          %262 = sbr.rel (%p260) target = $region40
        $region39: #{forward.1} parent=35 // pred_region
          %s263 = sand.u32 %s27, 1
          %s264 = sand.u32 %s27, 1
          %s265 = smul.addr %s264, 384
          %s266 = scalar_lea.vmem [#allocation2], %s265
          %s267 = smul.addr %s17, 4
          %s268 = scalar_lea.vmem %s0, %s267
          // Predicated region
          $region41: #{forward.1} parent=39 // pred_check
            _
          $region42: #{forward.1} parent=39 // pred_check_branch
            %270 = sbr.rel (0) target = $region44
          $region43: #{forward.1} parent=39 // pred_region
            // Predicated region
            $region45: #{forward.1} parent=43 // pred_check
              _
            $region46: #{forward.1} parent=43 // pred_check_branch
              %272 = sbr.rel target = $region48
            $region47: #{forward.1} parent=43 // pred_region
              // Predicated region
              $region60: #{forward.1} parent=47 // pred_check
                _
              $region61: #{forward.1} parent=47 // pred_check_branch
                %477 = sbr.rel (0) target = $region63
              $region62: #{forward.1} parent=47 // pred_region
                loop: start=0, step=1, limit=1
                $region64: #{forward.1} parent=62 // loop_pre_header
                  _
                $region65: #{forward.1} parent=62 // loop_header
                  %s479 = sphi 0, %s483
                  %p480 = scmp.ge.s32.totalorder %s479, 1
                  %s484 = sphi %s268, %s268
                  %s485 = sphi %s266, %s266
                $region66: #{forward.1} parent=62 // loop_header_branch
                  %482 = sbr.rel (%p480) target = $region70
                $region67: #{forward.1} parent=62 // loop_body
                  _
                $region68: #{forward.1} parent=62 // loop_footer
                  %s483 = sadd.s32 1, %s479
                $region69: #{forward.1} parent=62 // loop_footer_branch
                  %478 = sbr.rel target = $region65
                $region70: #{forward.1} parent=62 // loop_exit
                  _
                loop: start=0, step=1, limit=1
                $region71: #{forward.1} parent=62 // loop_pre_header
                  _
                $region72: #{forward.1} parent=62 // loop_header
                  %s488 = sphi 0, %s492
                  %p489 = scmp.ge.s32.totalorder %s488, 1
                  %s493 = sphi %s268, %s268
                  %s494 = sphi %s266, %s266
                $region73: #{forward.1} parent=62 // loop_header_branch
                  %491 = sbr.rel (%p489) target = $region77
                $region74: #{forward.1} parent=62 // loop_body
                  %v495 = vld [vmem:[%s493] sm:$0xf]
                  %496 = vst [vmem:[%s494] sm:$0xf] %v495
                  %v497 = vld [vmem:[%s493 + $0x8] sm:$0xf]
                  %498 = vst [vmem:[%s494 + $0x4] sm:$0xf] %v497
                  %v499 = vld [vmem:[%s493 + $0x10] sm:$0xf]
                  %500 = vst [vmem:[%s494 + $0x8] sm:$0xf] %v499
                  %v501 = vld [vmem:[%s493 + $0x18] sm:$0xf]
                  %502 = vst [vmem:[%s494 + $0xc] sm:$0xf] %v501
                  %v503 = vld [vmem:[%s493 + $0x20] sm:$0xf]
                  %504 = vst [vmem:[%s494 + $0x10] sm:$0xf] %v503
                  %v505 = vld [vmem:[%s493 + $0x28] sm:$0xf]
                  %506 = vst [vmem:[%s494 + $0x14] sm:$0xf] %v505
                  %v507 = vld [vmem:[%s493 + $0x30] sm:$0xf]
                  %508 = vst [vmem:[%s494 + $0x18] sm:$0xf] %v507
                  %v509 = vld [vmem:[%s493 + $0x38] sm:$0xf]
                  %510 = vst [vmem:[%s494 + $0x1c] sm:$0xf] %v509
                  %v511 = vld [vmem:[%s493 + $0x40] sm:$0xf]
                  %512 = vst [vmem:[%s494 + $0x20] sm:$0xf] %v511
                  %v513 = vld [vmem:[%s493 + $0x48] sm:$0xf]
                  %514 = vst [vmem:[%s494 + $0x24] sm:$0xf] %v513
                  %v515 = vld [vmem:[%s493 + $0x50] sm:$0xf]
                  %516 = vst [vmem:[%s494 + $0x28] sm:$0xf] %v515
                  %v517 = vld [vmem:[%s493 + $0x58] sm:$0xf]
                  %518 = vst [vmem:[%s494 + $0x2c] sm:$0xf] %v517
                  %v519 = vld [vmem:[%s493 + $0x60] sm:$0xf]
                  %520 = vst [vmem:[%s494 + $0x30] sm:$0xf] %v519
                  %v521 = vld [vmem:[%s493 + $0x68] sm:$0xf]
                  %522 = vst [vmem:[%s494 + $0x34] sm:$0xf] %v521
                  %v523 = vld [vmem:[%s493 + $0x70] sm:$0xf]
                  %524 = vst [vmem:[%s494 + $0x38] sm:$0xf] %v523
                  %v525 = vld [vmem:[%s493 + $0x78] sm:$0xf]
                  %526 = vst [vmem:[%s494 + $0x3c] sm:$0xf] %v525
                  %v527 = vld [vmem:[%s493 + $0x80] sm:$0xf]
                  %528 = vst [vmem:[%s494 + $0x40] sm:$0xf] %v527
                  %v529 = vld [vmem:[%s493 + $0x88] sm:$0xf]
                  %530 = vst [vmem:[%s494 + $0x44] sm:$0xf] %v529
                  %v531 = vld [vmem:[%s493 + $0x90] sm:$0xf]
                  %532 = vst [vmem:[%s494 + $0x48] sm:$0xf] %v531
                  %v533 = vld [vmem:[%s493 + $0x98] sm:$0xf]
                  %534 = vst [vmem:[%s494 + $0x4c] sm:$0xf] %v533
                  %v535 = vld [vmem:[%s493 + $0xa0] sm:$0xf]
                  %536 = vst [vmem:[%s494 + $0x50] sm:$0xf] %v535
                  %v537 = vld [vmem:[%s493 + $0xa8] sm:$0xf]
                  %538 = vst [vmem:[%s494 + $0x54] sm:$0xf] %v537
                  %v539 = vld [vmem:[%s493 + $0xb0] sm:$0xf]
                  %540 = vst [vmem:[%s494 + $0x58] sm:$0xf] %v539
                  %v541 = vld [vmem:[%s493 + $0xb8] sm:$0xf]
                  %542 = vst [vmem:[%s494 + $0x5c] sm:$0xf] %v541
                  %v543 = vld [vmem:[%s493 + $0xc0] sm:$0xf]
                  %544 = vst [vmem:[%s494 + $0x60] sm:$0xf] %v543
                  %v545 = vld [vmem:[%s493 + $0xc8] sm:$0xf]
                  %546 = vst [vmem:[%s494 + $0x64] sm:$0xf] %v545
                  %v547 = vld [vmem:[%s493 + $0xd0] sm:$0xf]
                  %548 = vst [vmem:[%s494 + $0x68] sm:$0xf] %v547
                  %v549 = vld [vmem:[%s493 + $0xd8] sm:$0xf]
                  %550 = vst [vmem:[%s494 + $0x6c] sm:$0xf] %v549
                  %v551 = vld [vmem:[%s493 + $0xe0] sm:$0xf]
                  %552 = vst [vmem:[%s494 + $0x70] sm:$0xf] %v551
                  %v553 = vld [vmem:[%s493 + $0xe8] sm:$0xf]
                  %554 = vst [vmem:[%s494 + $0x74] sm:$0xf] %v553
                  %v555 = vld [vmem:[%s493 + $0xf0] sm:$0xf]
                  %556 = vst [vmem:[%s494 + $0x78] sm:$0xf] %v555
                  %v557 = vld [vmem:[%s493 + $0xf8] sm:$0xf]
                  %558 = vst [vmem:[%s494 + $0x7c] sm:$0xf] %v557
                  %v559 = vld [vmem:[%s493 + $0x100] sm:$0xf]
                  %560 = vst [vmem:[%s494 + $0x80] sm:$0xf] %v559
                  %v561 = vld [vmem:[%s493 + $0x108] sm:$0xf]
                  %562 = vst [vmem:[%s494 + $0x84] sm:$0xf] %v561
                  %v563 = vld [vmem:[%s493 + $0x110] sm:$0xf]
                  %564 = vst [vmem:[%s494 + $0x88] sm:$0xf] %v563
                  %v565 = vld [vmem:[%s493 + $0x118] sm:$0xf]
                  %566 = vst [vmem:[%s494 + $0x8c] sm:$0xf] %v565
                  %v567 = vld [vmem:[%s493 + $0x120] sm:$0xf]
                  %568 = vst [vmem:[%s494 + $0x90] sm:$0xf] %v567
                  %v569 = vld [vmem:[%s493 + $0x128] sm:$0xf]
                  %570 = vst [vmem:[%s494 + $0x94] sm:$0xf] %v569
                  %v571 = vld [vmem:[%s493 + $0x130] sm:$0xf]
                  %572 = vst [vmem:[%s494 + $0x98] sm:$0xf] %v571
                  %v573 = vld [vmem:[%s493 + $0x138] sm:$0xf]
                  %574 = vst [vmem:[%s494 + $0x9c] sm:$0xf] %v573
                  %v575 = vld [vmem:[%s493 + $0x140] sm:$0xf]
                  %576 = vst [vmem:[%s494 + $0xa0] sm:$0xf] %v575
                  %v577 = vld [vmem:[%s493 + $0x148] sm:$0xf]
                  %578 = vst [vmem:[%s494 + $0xa4] sm:$0xf] %v577
                  %v579 = vld [vmem:[%s493 + $0x150] sm:$0xf]
                  %580 = vst [vmem:[%s494 + $0xa8] sm:$0xf] %v579
                  %v581 = vld [vmem:[%s493 + $0x158] sm:$0xf]
                  %582 = vst [vmem:[%s494 + $0xac] sm:$0xf] %v581
                  %v583 = vld [vmem:[%s493 + $0x160] sm:$0xf]
                  %584 = vst [vmem:[%s494 + $0xb0] sm:$0xf] %v583
                  %v585 = vld [vmem:[%s493 + $0x168] sm:$0xf]
                  %586 = vst [vmem:[%s494 + $0xb4] sm:$0xf] %v585
                  %v587 = vld [vmem:[%s493 + $0x170] sm:$0xf]
                  %588 = vst [vmem:[%s494 + $0xb8] sm:$0xf] %v587
                  %v589 = vld [vmem:[%s493 + $0x178] sm:$0xf]
                  %590 = vst [vmem:[%s494 + $0xbc] sm:$0xf] %v589
                  %v591 = vld [vmem:[%s493 + $0x180] sm:$0xf]
                  %592 = vst [vmem:[%s494 + $0xc0] sm:$0xf] %v591
                  %v593 = vld [vmem:[%s493 + $0x188] sm:$0xf]
                  %594 = vst [vmem:[%s494 + $0xc4] sm:$0xf] %v593
                  %v595 = vld [vmem:[%s493 + $0x190] sm:$0xf]
                  %596 = vst [vmem:[%s494 + $0xc8] sm:$0xf] %v595
                  %v597 = vld [vmem:[%s493 + $0x198] sm:$0xf]
                  %598 = vst [vmem:[%s494 + $0xcc] sm:$0xf] %v597
                  %v599 = vld [vmem:[%s493 + $0x1a0] sm:$0xf]
                  %600 = vst [vmem:[%s494 + $0xd0] sm:$0xf] %v599
                  %v601 = vld [vmem:[%s493 + $0x1a8] sm:$0xf]
                  %602 = vst [vmem:[%s494 + $0xd4] sm:$0xf] %v601
                  %v603 = vld [vmem:[%s493 + $0x1b0] sm:$0xf]
                  %604 = vst [vmem:[%s494 + $0xd8] sm:$0xf] %v603
                  %v605 = vld [vmem:[%s493 + $0x1b8] sm:$0xf]
                  %606 = vst [vmem:[%s494 + $0xdc] sm:$0xf] %v605
                  %v607 = vld [vmem:[%s493 + $0x1c0] sm:$0xf]
                  %608 = vst [vmem:[%s494 + $0xe0] sm:$0xf] %v607
                  %v609 = vld [vmem:[%s493 + $0x1c8] sm:$0xf]
                  %610 = vst [vmem:[%s494 + $0xe4] sm:$0xf] %v609
                  %v611 = vld [vmem:[%s493 + $0x1d0] sm:$0xf]
                  %612 = vst [vmem:[%s494 + $0xe8] sm:$0xf] %v611
                  %v613 = vld [vmem:[%s493 + $0x1d8] sm:$0xf]
                  %614 = vst [vmem:[%s494 + $0xec] sm:$0xf] %v613
                  %v615 = vld [vmem:[%s493 + $0x1e0] sm:$0xf]
                  %616 = vst [vmem:[%s494 + $0xf0] sm:$0xf] %v615
                  %v617 = vld [vmem:[%s493 + $0x1e8] sm:$0xf]
                  %618 = vst [vmem:[%s494 + $0xf4] sm:$0xf] %v617
                  %v619 = vld [vmem:[%s493 + $0x1f0] sm:$0xf]
                  %620 = vst [vmem:[%s494 + $0xf8] sm:$0xf] %v619
                  %v621 = vld [vmem:[%s493 + $0x1f8] sm:$0xf]
                  %622 = vst [vmem:[%s494 + $0xfc] sm:$0xf] %v621
                  %v623 = vld [vmem:[%s493 + $0x200] sm:$0xf]
                  %624 = vst [vmem:[%s494 + $0x100] sm:$0xf] %v623
                  %v625 = vld [vmem:[%s493 + $0x208] sm:$0xf]
                  %626 = vst [vmem:[%s494 + $0x104] sm:$0xf] %v625
                  %v627 = vld [vmem:[%s493 + $0x210] sm:$0xf]
                  %628 = vst [vmem:[%s494 + $0x108] sm:$0xf] %v627
                  %v629 = vld [vmem:[%s493 + $0x218] sm:$0xf]
                  %630 = vst [vmem:[%s494 + $0x10c] sm:$0xf] %v629
                  %v631 = vld [vmem:[%s493 + $0x220] sm:$0xf]
                  %632 = vst [vmem:[%s494 + $0x110] sm:$0xf] %v631
                  %v633 = vld [vmem:[%s493 + $0x228] sm:$0xf]
                  %634 = vst [vmem:[%s494 + $0x114] sm:$0xf] %v633
                  %v635 = vld [vmem:[%s493 + $0x230] sm:$0xf]
                  %636 = vst [vmem:[%s494 + $0x118] sm:$0xf] %v635
                  %v637 = vld [vmem:[%s493 + $0x238] sm:$0xf]
                  %638 = vst [vmem:[%s494 + $0x11c] sm:$0xf] %v637
                  %v639 = vld [vmem:[%s493 + $0x240] sm:$0xf]
                  %640 = vst [vmem:[%s494 + $0x120] sm:$0xf] %v639
                  %v641 = vld [vmem:[%s493 + $0x248] sm:$0xf]
                  %642 = vst [vmem:[%s494 + $0x124] sm:$0xf] %v641
                  %v643 = vld [vmem:[%s493 + $0x250] sm:$0xf]
                  %644 = vst [vmem:[%s494 + $0x128] sm:$0xf] %v643
                  %v645 = vld [vmem:[%s493 + $0x258] sm:$0xf]
                  %646 = vst [vmem:[%s494 + $0x12c] sm:$0xf] %v645
                  %v647 = vld [vmem:[%s493 + $0x260] sm:$0xf]
                  %648 = vst [vmem:[%s494 + $0x130] sm:$0xf] %v647
                  %v649 = vld [vmem:[%s493 + $0x268] sm:$0xf]
                  %650 = vst [vmem:[%s494 + $0x134] sm:$0xf] %v649
                  %v651 = vld [vmem:[%s493 + $0x270] sm:$0xf]
                  %652 = vst [vmem:[%s494 + $0x138] sm:$0xf] %v651
                  %v653 = vld [vmem:[%s493 + $0x278] sm:$0xf]
                  %654 = vst [vmem:[%s494 + $0x13c] sm:$0xf] %v653
                  %v655 = vld [vmem:[%s493 + $0x280] sm:$0xf]
                  %656 = vst [vmem:[%s494 + $0x140] sm:$0xf] %v655
                  %v657 = vld [vmem:[%s493 + $0x288] sm:$0xf]
                  %658 = vst [vmem:[%s494 + $0x144] sm:$0xf] %v657
                  %v659 = vld [vmem:[%s493 + $0x290] sm:$0xf]
                  %660 = vst [vmem:[%s494 + $0x148] sm:$0xf] %v659
                  %v661 = vld [vmem:[%s493 + $0x298] sm:$0xf]
                  %662 = vst [vmem:[%s494 + $0x14c] sm:$0xf] %v661
                  %v663 = vld [vmem:[%s493 + $0x2a0] sm:$0xf]
                  %664 = vst [vmem:[%s494 + $0x150] sm:$0xf] %v663
                  %v665 = vld [vmem:[%s493 + $0x2a8] sm:$0xf]
                  %666 = vst [vmem:[%s494 + $0x154] sm:$0xf] %v665
                  %v667 = vld [vmem:[%s493 + $0x2b0] sm:$0xf]
                  %668 = vst [vmem:[%s494 + $0x158] sm:$0xf] %v667
                  %v669 = vld [vmem:[%s493 + $0x2b8] sm:$0xf]
                  %670 = vst [vmem:[%s494 + $0x15c] sm:$0xf] %v669
                  %v671 = vld [vmem:[%s493 + $0x2c0] sm:$0xf]
                  %672 = vst [vmem:[%s494 + $0x160] sm:$0xf] %v671
                  %v673 = vld [vmem:[%s493 + $0x2c8] sm:$0xf]
                  %674 = vst [vmem:[%s494 + $0x164] sm:$0xf] %v673
                  %v675 = vld [vmem:[%s493 + $0x2d0] sm:$0xf]
                  %676 = vst [vmem:[%s494 + $0x168] sm:$0xf] %v675
                  %v677 = vld [vmem:[%s493 + $0x2d8] sm:$0xf]
                  %678 = vst [vmem:[%s494 + $0x16c] sm:$0xf] %v677
                  %v679 = vld [vmem:[%s493 + $0x2e0] sm:$0xf]
                  %680 = vst [vmem:[%s494 + $0x170] sm:$0xf] %v679
                  %v681 = vld [vmem:[%s493 + $0x2e8] sm:$0xf]
                  %682 = vst [vmem:[%s494 + $0x174] sm:$0xf] %v681
                  %v683 = vld [vmem:[%s493 + $0x2f0] sm:$0xf]
                  %684 = vst [vmem:[%s494 + $0x178] sm:$0xf] %v683
                  %v685 = vld [vmem:[%s493 + $0x2f8] sm:$0xf]
                  %686 = vst [vmem:[%s494 + $0x17c] sm:$0xf] %v685
                $region75: #{forward.1} parent=62 // loop_footer
                  %s492 = sadd.s32 1, %s488
                $region76: #{forward.1} parent=62 // loop_footer_branch
                  %487 = sbr.rel target = $region72
                $region77: #{forward.1} parent=62 // loop_exit
                  _
              $region63: #{forward.1} parent=47 // pred_fallthru
                _
            $region48: #{forward.1} parent=43 // pred_fallthru
              _
            // Predicated region
            $region49: #{forward.1} parent=43 // pred_check
              _
            $region50: #{forward.1} parent=43 // pred_check_branch
              %274 = sbr.rel (0) target = $region52
            $region51: #{forward.1} parent=43 // pred_region
              loop: start=0, step=1, limit=1
              $region53: #{forward.1} parent=51 // loop_pre_header
                _
              $region54: #{forward.1} parent=51 // loop_header
                %s277 = sphi 0, %s281
                %p278 = scmp.ge.s32.totalorder %s277, 1
                %s282 = sphi %s268, %s268
                %s283 = sphi %s266, %s266
              $region55: #{forward.1} parent=51 // loop_header_branch
                %280 = sbr.rel (%p278) target = $region59
              $region56: #{forward.1} parent=51 // loop_body
                %v284 = vld [vmem:[%s282] sm:$0xf]
                %285 = vst [vmem:[%s283] sm:$0xf] %v284
                %v286 = vld [vmem:[%s282 + $0x8] sm:$0xf]
                %287 = vst [vmem:[%s283 + $0x4] sm:$0xf] %v286
                %v288 = vld [vmem:[%s282 + $0x10] sm:$0xf]
                %289 = vst [vmem:[%s283 + $0x8] sm:$0xf] %v288
                %v290 = vld [vmem:[%s282 + $0x18] sm:$0xf]
                %291 = vst [vmem:[%s283 + $0xc] sm:$0xf] %v290
                %v292 = vld [vmem:[%s282 + $0x20] sm:$0xf]
                %293 = vst [vmem:[%s283 + $0x10] sm:$0xf] %v292
                %v294 = vld [vmem:[%s282 + $0x28] sm:$0xf]
                %295 = vst [vmem:[%s283 + $0x14] sm:$0xf] %v294
                %v296 = vld [vmem:[%s282 + $0x30] sm:$0xf]
                %297 = vst [vmem:[%s283 + $0x18] sm:$0xf] %v296
                %v298 = vld [vmem:[%s282 + $0x38] sm:$0xf]
                %299 = vst [vmem:[%s283 + $0x1c] sm:$0xf] %v298
                %v300 = vld [vmem:[%s282 + $0x40] sm:$0xf]
                %301 = vst [vmem:[%s283 + $0x20] sm:$0xf] %v300
                %v302 = vld [vmem:[%s282 + $0x48] sm:$0xf]
                %303 = vst [vmem:[%s283 + $0x24] sm:$0xf] %v302
                %v304 = vld [vmem:[%s282 + $0x50] sm:$0xf]
                %305 = vst [vmem:[%s283 + $0x28] sm:$0xf] %v304
                %v306 = vld [vmem:[%s282 + $0x58] sm:$0xf]
                %307 = vst [vmem:[%s283 + $0x2c] sm:$0xf] %v306
                %v308 = vld [vmem:[%s282 + $0x60] sm:$0xf]
                %309 = vst [vmem:[%s283 + $0x30] sm:$0xf] %v308
                %v310 = vld [vmem:[%s282 + $0x68] sm:$0xf]
                %311 = vst [vmem:[%s283 + $0x34] sm:$0xf] %v310
                %v312 = vld [vmem:[%s282 + $0x70] sm:$0xf]
                %313 = vst [vmem:[%s283 + $0x38] sm:$0xf] %v312
                %v314 = vld [vmem:[%s282 + $0x78] sm:$0xf]
                %315 = vst [vmem:[%s283 + $0x3c] sm:$0xf] %v314
                %v316 = vld [vmem:[%s282 + $0x80] sm:$0xf]
                %317 = vst [vmem:[%s283 + $0x40] sm:$0xf] %v316
                %v318 = vld [vmem:[%s282 + $0x88] sm:$0xf]
                %319 = vst [vmem:[%s283 + $0x44] sm:$0xf] %v318
                %v320 = vld [vmem:[%s282 + $0x90] sm:$0xf]
                %321 = vst [vmem:[%s283 + $0x48] sm:$0xf] %v320
                %v322 = vld [vmem:[%s282 + $0x98] sm:$0xf]
                %323 = vst [vmem:[%s283 + $0x4c] sm:$0xf] %v322
                %v324 = vld [vmem:[%s282 + $0xa0] sm:$0xf]
                %325 = vst [vmem:[%s283 + $0x50] sm:$0xf] %v324
                %v326 = vld [vmem:[%s282 + $0xa8] sm:$0xf]
                %327 = vst [vmem:[%s283 + $0x54] sm:$0xf] %v326
                %v328 = vld [vmem:[%s282 + $0xb0] sm:$0xf]
                %329 = vst [vmem:[%s283 + $0x58] sm:$0xf] %v328
                %v330 = vld [vmem:[%s282 + $0xb8] sm:$0xf]
                %331 = vst [vmem:[%s283 + $0x5c] sm:$0xf] %v330
                %v332 = vld [vmem:[%s282 + $0xc0] sm:$0xf]
                %333 = vst [vmem:[%s283 + $0x60] sm:$0xf] %v332
                %v334 = vld [vmem:[%s282 + $0xc8] sm:$0xf]
                %335 = vst [vmem:[%s283 + $0x64] sm:$0xf] %v334
                %v336 = vld [vmem:[%s282 + $0xd0] sm:$0xf]
                %337 = vst [vmem:[%s283 + $0x68] sm:$0xf] %v336
                %v338 = vld [vmem:[%s282 + $0xd8] sm:$0xf]
                %339 = vst [vmem:[%s283 + $0x6c] sm:$0xf] %v338
                %v340 = vld [vmem:[%s282 + $0xe0] sm:$0xf]
                %341 = vst [vmem:[%s283 + $0x70] sm:$0xf] %v340
                %v342 = vld [vmem:[%s282 + $0xe8] sm:$0xf]
                %343 = vst [vmem:[%s283 + $0x74] sm:$0xf] %v342
                %v344 = vld [vmem:[%s282 + $0xf0] sm:$0xf]
                %345 = vst [vmem:[%s283 + $0x78] sm:$0xf] %v344
                %v346 = vld [vmem:[%s282 + $0xf8] sm:$0xf]
                %347 = vst [vmem:[%s283 + $0x7c] sm:$0xf] %v346
                %v348 = vld [vmem:[%s282 + $0x100] sm:$0xf]
                %349 = vst [vmem:[%s283 + $0x80] sm:$0xf] %v348
                %v350 = vld [vmem:[%s282 + $0x108] sm:$0xf]
                %351 = vst [vmem:[%s283 + $0x84] sm:$0xf] %v350
                %v352 = vld [vmem:[%s282 + $0x110] sm:$0xf]
                %353 = vst [vmem:[%s283 + $0x88] sm:$0xf] %v352
                %v354 = vld [vmem:[%s282 + $0x118] sm:$0xf]
                %355 = vst [vmem:[%s283 + $0x8c] sm:$0xf] %v354
                %v356 = vld [vmem:[%s282 + $0x120] sm:$0xf]
                %357 = vst [vmem:[%s283 + $0x90] sm:$0xf] %v356
                %v358 = vld [vmem:[%s282 + $0x128] sm:$0xf]
                %359 = vst [vmem:[%s283 + $0x94] sm:$0xf] %v358
                %v360 = vld [vmem:[%s282 + $0x130] sm:$0xf]
                %361 = vst [vmem:[%s283 + $0x98] sm:$0xf] %v360
                %v362 = vld [vmem:[%s282 + $0x138] sm:$0xf]
                %363 = vst [vmem:[%s283 + $0x9c] sm:$0xf] %v362
                %v364 = vld [vmem:[%s282 + $0x140] sm:$0xf]
                %365 = vst [vmem:[%s283 + $0xa0] sm:$0xf] %v364
                %v366 = vld [vmem:[%s282 + $0x148] sm:$0xf]
                %367 = vst [vmem:[%s283 + $0xa4] sm:$0xf] %v366
                %v368 = vld [vmem:[%s282 + $0x150] sm:$0xf]
                %369 = vst [vmem:[%s283 + $0xa8] sm:$0xf] %v368
                %v370 = vld [vmem:[%s282 + $0x158] sm:$0xf]
                %371 = vst [vmem:[%s283 + $0xac] sm:$0xf] %v370
                %v372 = vld [vmem:[%s282 + $0x160] sm:$0xf]
                %373 = vst [vmem:[%s283 + $0xb0] sm:$0xf] %v372
                %v374 = vld [vmem:[%s282 + $0x168] sm:$0xf]
                %375 = vst [vmem:[%s283 + $0xb4] sm:$0xf] %v374
                %v376 = vld [vmem:[%s282 + $0x170] sm:$0xf]
                %377 = vst [vmem:[%s283 + $0xb8] sm:$0xf] %v376
                %v378 = vld [vmem:[%s282 + $0x178] sm:$0xf]
                %379 = vst [vmem:[%s283 + $0xbc] sm:$0xf] %v378
                %v380 = vld [vmem:[%s282 + $0x180] sm:$0xf]
                %381 = vst [vmem:[%s283 + $0xc0] sm:$0xf] %v380
                %v382 = vld [vmem:[%s282 + $0x188] sm:$0xf]
                %383 = vst [vmem:[%s283 + $0xc4] sm:$0xf] %v382
                %v384 = vld [vmem:[%s282 + $0x190] sm:$0xf]
                %385 = vst [vmem:[%s283 + $0xc8] sm:$0xf] %v384
                %v386 = vld [vmem:[%s282 + $0x198] sm:$0xf]
                %387 = vst [vmem:[%s283 + $0xcc] sm:$0xf] %v386
                %v388 = vld [vmem:[%s282 + $0x1a0] sm:$0xf]
                %389 = vst [vmem:[%s283 + $0xd0] sm:$0xf] %v388
                %v390 = vld [vmem:[%s282 + $0x1a8] sm:$0xf]
                %391 = vst [vmem:[%s283 + $0xd4] sm:$0xf] %v390
                %v392 = vld [vmem:[%s282 + $0x1b0] sm:$0xf]
                %393 = vst [vmem:[%s283 + $0xd8] sm:$0xf] %v392
                %v394 = vld [vmem:[%s282 + $0x1b8] sm:$0xf]
                %395 = vst [vmem:[%s283 + $0xdc] sm:$0xf] %v394
                %v396 = vld [vmem:[%s282 + $0x1c0] sm:$0xf]
                %397 = vst [vmem:[%s283 + $0xe0] sm:$0xf] %v396
                %v398 = vld [vmem:[%s282 + $0x1c8] sm:$0xf]
                %399 = vst [vmem:[%s283 + $0xe4] sm:$0xf] %v398
                %v400 = vld [vmem:[%s282 + $0x1d0] sm:$0xf]
                %401 = vst [vmem:[%s283 + $0xe8] sm:$0xf] %v400
                %v402 = vld [vmem:[%s282 + $0x1d8] sm:$0xf]
                %403 = vst [vmem:[%s283 + $0xec] sm:$0xf] %v402
                %v404 = vld [vmem:[%s282 + $0x1e0] sm:$0xf]
                %405 = vst [vmem:[%s283 + $0xf0] sm:$0xf] %v404
                %v406 = vld [vmem:[%s282 + $0x1e8] sm:$0xf]
                %407 = vst [vmem:[%s283 + $0xf4] sm:$0xf] %v406
                %v408 = vld [vmem:[%s282 + $0x1f0] sm:$0xf]
                %409 = vst [vmem:[%s283 + $0xf8] sm:$0xf] %v408
                %v410 = vld [vmem:[%s282 + $0x1f8] sm:$0xf]
                %411 = vst [vmem:[%s283 + $0xfc] sm:$0xf] %v410
                %v412 = vld [vmem:[%s282 + $0x200] sm:$0xf]
                %413 = vst [vmem:[%s283 + $0x100] sm:$0xf] %v412
                %v414 = vld [vmem:[%s282 + $0x208] sm:$0xf]
                %415 = vst [vmem:[%s283 + $0x104] sm:$0xf] %v414
                %v416 = vld [vmem:[%s282 + $0x210] sm:$0xf]
                %417 = vst [vmem:[%s283 + $0x108] sm:$0xf] %v416
                %v418 = vld [vmem:[%s282 + $0x218] sm:$0xf]
                %419 = vst [vmem:[%s283 + $0x10c] sm:$0xf] %v418
                %v420 = vld [vmem:[%s282 + $0x220] sm:$0xf]
                %421 = vst [vmem:[%s283 + $0x110] sm:$0xf] %v420
                %v422 = vld [vmem:[%s282 + $0x228] sm:$0xf]
                %423 = vst [vmem:[%s283 + $0x114] sm:$0xf] %v422
                %v424 = vld [vmem:[%s282 + $0x230] sm:$0xf]
                %425 = vst [vmem:[%s283 + $0x118] sm:$0xf] %v424
                %v426 = vld [vmem:[%s282 + $0x238] sm:$0xf]
                %427 = vst [vmem:[%s283 + $0x11c] sm:$0xf] %v426
                %v428 = vld [vmem:[%s282 + $0x240] sm:$0xf]
                %429 = vst [vmem:[%s283 + $0x120] sm:$0xf] %v428
                %v430 = vld [vmem:[%s282 + $0x248] sm:$0xf]
                %431 = vst [vmem:[%s283 + $0x124] sm:$0xf] %v430
                %v432 = vld [vmem:[%s282 + $0x250] sm:$0xf]
                %433 = vst [vmem:[%s283 + $0x128] sm:$0xf] %v432
                %v434 = vld [vmem:[%s282 + $0x258] sm:$0xf]
                %435 = vst [vmem:[%s283 + $0x12c] sm:$0xf] %v434
                %v436 = vld [vmem:[%s282 + $0x260] sm:$0xf]
                %437 = vst [vmem:[%s283 + $0x130] sm:$0xf] %v436
                %v438 = vld [vmem:[%s282 + $0x268] sm:$0xf]
                %439 = vst [vmem:[%s283 + $0x134] sm:$0xf] %v438
                %v440 = vld [vmem:[%s282 + $0x270] sm:$0xf]
                %441 = vst [vmem:[%s283 + $0x138] sm:$0xf] %v440
                %v442 = vld [vmem:[%s282 + $0x278] sm:$0xf]
                %443 = vst [vmem:[%s283 + $0x13c] sm:$0xf] %v442
                %v444 = vld [vmem:[%s282 + $0x280] sm:$0xf]
                %445 = vst [vmem:[%s283 + $0x140] sm:$0xf] %v444
                %v446 = vld [vmem:[%s282 + $0x288] sm:$0xf]
                %447 = vst [vmem:[%s283 + $0x144] sm:$0xf] %v446
                %v448 = vld [vmem:[%s282 + $0x290] sm:$0xf]
                %449 = vst [vmem:[%s283 + $0x148] sm:$0xf] %v448
                %v450 = vld [vmem:[%s282 + $0x298] sm:$0xf]
                %451 = vst [vmem:[%s283 + $0x14c] sm:$0xf] %v450
                %v452 = vld [vmem:[%s282 + $0x2a0] sm:$0xf]
                %453 = vst [vmem:[%s283 + $0x150] sm:$0xf] %v452
                %v454 = vld [vmem:[%s282 + $0x2a8] sm:$0xf]
                %455 = vst [vmem:[%s283 + $0x154] sm:$0xf] %v454
                %v456 = vld [vmem:[%s282 + $0x2b0] sm:$0xf]
                %457 = vst [vmem:[%s283 + $0x158] sm:$0xf] %v456
                %v458 = vld [vmem:[%s282 + $0x2b8] sm:$0xf]
                %459 = vst [vmem:[%s283 + $0x15c] sm:$0xf] %v458
                %v460 = vld [vmem:[%s282 + $0x2c0] sm:$0xf]
                %461 = vst [vmem:[%s283 + $0x160] sm:$0xf] %v460
                %v462 = vld [vmem:[%s282 + $0x2c8] sm:$0xf]
                %463 = vst [vmem:[%s283 + $0x164] sm:$0xf] %v462
                %v464 = vld [vmem:[%s282 + $0x2d0] sm:$0xf]
                %465 = vst [vmem:[%s283 + $0x168] sm:$0xf] %v464
                %v466 = vld [vmem:[%s282 + $0x2d8] sm:$0xf]
                %467 = vst [vmem:[%s283 + $0x16c] sm:$0xf] %v466
                %v468 = vld [vmem:[%s282 + $0x2e0] sm:$0xf]
                %469 = vst [vmem:[%s283 + $0x170] sm:$0xf] %v468
                %v470 = vld [vmem:[%s282 + $0x2e8] sm:$0xf]
                %471 = vst [vmem:[%s283 + $0x174] sm:$0xf] %v470
                %v472 = vld [vmem:[%s282 + $0x2f0] sm:$0xf]
                %473 = vst [vmem:[%s283 + $0x178] sm:$0xf] %v472
                %v474 = vld [vmem:[%s282 + $0x2f8] sm:$0xf]
                %475 = vst [vmem:[%s283 + $0x17c] sm:$0xf] %v474
              $region57: #{forward.1} parent=51 // loop_footer
                %s281 = sadd.s32 1, %s277
              $region58: #{forward.1} parent=51 // loop_footer_branch
                %276 = sbr.rel target = $region54
              $region59: #{forward.1} parent=51 // loop_exit
                _
            $region52: #{forward.1} parent=43 // pred_fallthru
              _
          $region44: #{forward.1} parent=39 // pred_fallthru
            _
          %687 = vnop
        $region40: #{forward.1} parent=35 // pred_fallthru
          _
        // Predicated region
        $region78: #{forward.1} parent=35 // pred_check
          %p688 = pneg %p63
        $region79: #{forward.1} parent=35 // pred_check_branch
          %690 = sbr.rel (%p688) target = $region81
        $region80: #{forward.1} parent=35 // pred_region
          %s691 = sand.u32 %s53, 1
          %s692 = sand.u32 %s53, 1
          %s693 = smul.addr %s692, 384
          %s694 = scalar_lea.vmem [#allocation3], %s693
          %s695 = smul.addr %s17, 4
          %s696 = scalar_lea.vmem %s1, %s695
          // Predicated region
          $region82: #{forward.1} parent=80 // pred_check
            _
          $region83: #{forward.1} parent=80 // pred_check_branch
            %698 = sbr.rel (0) target = $region85
          $region84: #{forward.1} parent=80 // pred_region
            // Predicated region
            $region86: #{forward.1} parent=84 // pred_check
              _
            $region87: #{forward.1} parent=84 // pred_check_branch
              %700 = sbr.rel target = $region89
            $region88: #{forward.1} parent=84 // pred_region
              // Predicated region
              $region101: #{forward.1} parent=88 // pred_check
                _
              $region102: #{forward.1} parent=88 // pred_check_branch
                %905 = sbr.rel (0) target = $region104
              $region103: #{forward.1} parent=88 // pred_region
                loop: start=0, step=1, limit=1
                $region105: #{forward.1} parent=103 // loop_pre_header
                  _
                $region106: #{forward.1} parent=103 // loop_header
                  %s907 = sphi 0, %s911
                  %p908 = scmp.ge.s32.totalorder %s907, 1
                  %s912 = sphi %s696, %s696
                  %s913 = sphi %s694, %s694
                $region107: #{forward.1} parent=103 // loop_header_branch
                  %910 = sbr.rel (%p908) target = $region111
                $region108: #{forward.1} parent=103 // loop_body
                  _
                $region109: #{forward.1} parent=103 // loop_footer
                  %s911 = sadd.s32 1, %s907
                $region110: #{forward.1} parent=103 // loop_footer_branch
                  %906 = sbr.rel target = $region106
                $region111: #{forward.1} parent=103 // loop_exit
                  _
                loop: start=0, step=1, limit=1
                $region112: #{forward.1} parent=103 // loop_pre_header
                  _
                $region113: #{forward.1} parent=103 // loop_header
                  %s916 = sphi 0, %s920
                  %p917 = scmp.ge.s32.totalorder %s916, 1
                  %s921 = sphi %s696, %s696
                  %s922 = sphi %s694, %s694
                $region114: #{forward.1} parent=103 // loop_header_branch
                  %919 = sbr.rel (%p917) target = $region118
                $region115: #{forward.1} parent=103 // loop_body
                  %v923 = vld [vmem:[%s921] sm:$0xf]
                  %924 = vst [vmem:[%s922] sm:$0xf] %v923
                  %v925 = vld [vmem:[%s921 + $0x8] sm:$0xf]
                  %926 = vst [vmem:[%s922 + $0x4] sm:$0xf] %v925
                  %v927 = vld [vmem:[%s921 + $0x10] sm:$0xf]
                  %928 = vst [vmem:[%s922 + $0x8] sm:$0xf] %v927
                  %v929 = vld [vmem:[%s921 + $0x18] sm:$0xf]
                  %930 = vst [vmem:[%s922 + $0xc] sm:$0xf] %v929
                  %v931 = vld [vmem:[%s921 + $0x20] sm:$0xf]
                  %932 = vst [vmem:[%s922 + $0x10] sm:$0xf] %v931
                  %v933 = vld [vmem:[%s921 + $0x28] sm:$0xf]
                  %934 = vst [vmem:[%s922 + $0x14] sm:$0xf] %v933
                  %v935 = vld [vmem:[%s921 + $0x30] sm:$0xf]
                  %936 = vst [vmem:[%s922 + $0x18] sm:$0xf] %v935
                  %v937 = vld [vmem:[%s921 + $0x38] sm:$0xf]
                  %938 = vst [vmem:[%s922 + $0x1c] sm:$0xf] %v937
                  %v939 = vld [vmem:[%s921 + $0x40] sm:$0xf]
                  %940 = vst [vmem:[%s922 + $0x20] sm:$0xf] %v939
                  %v941 = vld [vmem:[%s921 + $0x48] sm:$0xf]
                  %942 = vst [vmem:[%s922 + $0x24] sm:$0xf] %v941
                  %v943 = vld [vmem:[%s921 + $0x50] sm:$0xf]
                  %944 = vst [vmem:[%s922 + $0x28] sm:$0xf] %v943
                  %v945 = vld [vmem:[%s921 + $0x58] sm:$0xf]
                  %946 = vst [vmem:[%s922 + $0x2c] sm:$0xf] %v945
                  %v947 = vld [vmem:[%s921 + $0x60] sm:$0xf]
                  %948 = vst [vmem:[%s922 + $0x30] sm:$0xf] %v947
                  %v949 = vld [vmem:[%s921 + $0x68] sm:$0xf]
                  %950 = vst [vmem:[%s922 + $0x34] sm:$0xf] %v949
                  %v951 = vld [vmem:[%s921 + $0x70] sm:$0xf]
                  %952 = vst [vmem:[%s922 + $0x38] sm:$0xf] %v951
                  %v953 = vld [vmem:[%s921 + $0x78] sm:$0xf]
                  %954 = vst [vmem:[%s922 + $0x3c] sm:$0xf] %v953
                  %v955 = vld [vmem:[%s921 + $0x80] sm:$0xf]
                  %956 = vst [vmem:[%s922 + $0x40] sm:$0xf] %v955
                  %v957 = vld [vmem:[%s921 + $0x88] sm:$0xf]
                  %958 = vst [vmem:[%s922 + $0x44] sm:$0xf] %v957
                  %v959 = vld [vmem:[%s921 + $0x90] sm:$0xf]
                  %960 = vst [vmem:[%s922 + $0x48] sm:$0xf] %v959
                  %v961 = vld [vmem:[%s921 + $0x98] sm:$0xf]
                  %962 = vst [vmem:[%s922 + $0x4c] sm:$0xf] %v961
                  %v963 = vld [vmem:[%s921 + $0xa0] sm:$0xf]
                  %964 = vst [vmem:[%s922 + $0x50] sm:$0xf] %v963
                  %v965 = vld [vmem:[%s921 + $0xa8] sm:$0xf]
                  %966 = vst [vmem:[%s922 + $0x54] sm:$0xf] %v965
                  %v967 = vld [vmem:[%s921 + $0xb0] sm:$0xf]
                  %968 = vst [vmem:[%s922 + $0x58] sm:$0xf] %v967
                  %v969 = vld [vmem:[%s921 + $0xb8] sm:$0xf]
                  %970 = vst [vmem:[%s922 + $0x5c] sm:$0xf] %v969
                  %v971 = vld [vmem:[%s921 + $0xc0] sm:$0xf]
                  %972 = vst [vmem:[%s922 + $0x60] sm:$0xf] %v971
                  %v973 = vld [vmem:[%s921 + $0xc8] sm:$0xf]
                  %974 = vst [vmem:[%s922 + $0x64] sm:$0xf] %v973
                  %v975 = vld [vmem:[%s921 + $0xd0] sm:$0xf]
                  %976 = vst [vmem:[%s922 + $0x68] sm:$0xf] %v975
                  %v977 = vld [vmem:[%s921 + $0xd8] sm:$0xf]
                  %978 = vst [vmem:[%s922 + $0x6c] sm:$0xf] %v977
                  %v979 = vld [vmem:[%s921 + $0xe0] sm:$0xf]
                  %980 = vst [vmem:[%s922 + $0x70] sm:$0xf] %v979
                  %v981 = vld [vmem:[%s921 + $0xe8] sm:$0xf]
                  %982 = vst [vmem:[%s922 + $0x74] sm:$0xf] %v981
                  %v983 = vld [vmem:[%s921 + $0xf0] sm:$0xf]
                  %984 = vst [vmem:[%s922 + $0x78] sm:$0xf] %v983
                  %v985 = vld [vmem:[%s921 + $0xf8] sm:$0xf]
                  %986 = vst [vmem:[%s922 + $0x7c] sm:$0xf] %v985
                  %v987 = vld [vmem:[%s921 + $0x100] sm:$0xf]
                  %988 = vst [vmem:[%s922 + $0x80] sm:$0xf] %v987
                  %v989 = vld [vmem:[%s921 + $0x108] sm:$0xf]
                  %990 = vst [vmem:[%s922 + $0x84] sm:$0xf] %v989
                  %v991 = vld [vmem:[%s921 + $0x110] sm:$0xf]
                  %992 = vst [vmem:[%s922 + $0x88] sm:$0xf] %v991
                  %v993 = vld [vmem:[%s921 + $0x118] sm:$0xf]
                  %994 = vst [vmem:[%s922 + $0x8c] sm:$0xf] %v993
                  %v995 = vld [vmem:[%s921 + $0x120] sm:$0xf]
                  %996 = vst [vmem:[%s922 + $0x90] sm:$0xf] %v995
                  %v997 = vld [vmem:[%s921 + $0x128] sm:$0xf]
                  %998 = vst [vmem:[%s922 + $0x94] sm:$0xf] %v997
                  %v999 = vld [vmem:[%s921 + $0x130] sm:$0xf]
                  %1000 = vst [vmem:[%s922 + $0x98] sm:$0xf] %v999
                  %v1001 = vld [vmem:[%s921 + $0x138] sm:$0xf]
                  %1002 = vst [vmem:[%s922 + $0x9c] sm:$0xf] %v1001
                  %v1003 = vld [vmem:[%s921 + $0x140] sm:$0xf]
                  %1004 = vst [vmem:[%s922 + $0xa0] sm:$0xf] %v1003
                  %v1005 = vld [vmem:[%s921 + $0x148] sm:$0xf]
                  %1006 = vst [vmem:[%s922 + $0xa4] sm:$0xf] %v1005
                  %v1007 = vld [vmem:[%s921 + $0x150] sm:$0xf]
                  %1008 = vst [vmem:[%s922 + $0xa8] sm:$0xf] %v1007
                  %v1009 = vld [vmem:[%s921 + $0x158] sm:$0xf]
                  %1010 = vst [vmem:[%s922 + $0xac] sm:$0xf] %v1009
                  %v1011 = vld [vmem:[%s921 + $0x160] sm:$0xf]
                  %1012 = vst [vmem:[%s922 + $0xb0] sm:$0xf] %v1011
                  %v1013 = vld [vmem:[%s921 + $0x168] sm:$0xf]
                  %1014 = vst [vmem:[%s922 + $0xb4] sm:$0xf] %v1013
                  %v1015 = vld [vmem:[%s921 + $0x170] sm:$0xf]
                  %1016 = vst [vmem:[%s922 + $0xb8] sm:$0xf] %v1015
                  %v1017 = vld [vmem:[%s921 + $0x178] sm:$0xf]
                  %1018 = vst [vmem:[%s922 + $0xbc] sm:$0xf] %v1017
                  %v1019 = vld [vmem:[%s921 + $0x180] sm:$0xf]
                  %1020 = vst [vmem:[%s922 + $0xc0] sm:$0xf] %v1019
                  %v1021 = vld [vmem:[%s921 + $0x188] sm:$0xf]
                  %1022 = vst [vmem:[%s922 + $0xc4] sm:$0xf] %v1021
                  %v1023 = vld [vmem:[%s921 + $0x190] sm:$0xf]
                  %1024 = vst [vmem:[%s922 + $0xc8] sm:$0xf] %v1023
                  %v1025 = vld [vmem:[%s921 + $0x198] sm:$0xf]
                  %1026 = vst [vmem:[%s922 + $0xcc] sm:$0xf] %v1025
                  %v1027 = vld [vmem:[%s921 + $0x1a0] sm:$0xf]
                  %1028 = vst [vmem:[%s922 + $0xd0] sm:$0xf] %v1027
                  %v1029 = vld [vmem:[%s921 + $0x1a8] sm:$0xf]
                  %1030 = vst [vmem:[%s922 + $0xd4] sm:$0xf] %v1029
                  %v1031 = vld [vmem:[%s921 + $0x1b0] sm:$0xf]
                  %1032 = vst [vmem:[%s922 + $0xd8] sm:$0xf] %v1031
                  %v1033 = vld [vmem:[%s921 + $0x1b8] sm:$0xf]
                  %1034 = vst [vmem:[%s922 + $0xdc] sm:$0xf] %v1033
                  %v1035 = vld [vmem:[%s921 + $0x1c0] sm:$0xf]
                  %1036 = vst [vmem:[%s922 + $0xe0] sm:$0xf] %v1035
                  %v1037 = vld [vmem:[%s921 + $0x1c8] sm:$0xf]
                  %1038 = vst [vmem:[%s922 + $0xe4] sm:$0xf] %v1037
                  %v1039 = vld [vmem:[%s921 + $0x1d0] sm:$0xf]
                  %1040 = vst [vmem:[%s922 + $0xe8] sm:$0xf] %v1039
                  %v1041 = vld [vmem:[%s921 + $0x1d8] sm:$0xf]
                  %1042 = vst [vmem:[%s922 + $0xec] sm:$0xf] %v1041
                  %v1043 = vld [vmem:[%s921 + $0x1e0] sm:$0xf]
                  %1044 = vst [vmem:[%s922 + $0xf0] sm:$0xf] %v1043
                  %v1045 = vld [vmem:[%s921 + $0x1e8] sm:$0xf]
                  %1046 = vst [vmem:[%s922 + $0xf4] sm:$0xf] %v1045
                  %v1047 = vld [vmem:[%s921 + $0x1f0] sm:$0xf]
                  %1048 = vst [vmem:[%s922 + $0xf8] sm:$0xf] %v1047
                  %v1049 = vld [vmem:[%s921 + $0x1f8] sm:$0xf]
                  %1050 = vst [vmem:[%s922 + $0xfc] sm:$0xf] %v1049
                  %v1051 = vld [vmem:[%s921 + $0x200] sm:$0xf]
                  %1052 = vst [vmem:[%s922 + $0x100] sm:$0xf] %v1051
                  %v1053 = vld [vmem:[%s921 + $0x208] sm:$0xf]
                  %1054 = vst [vmem:[%s922 + $0x104] sm:$0xf] %v1053
                  %v1055 = vld [vmem:[%s921 + $0x210] sm:$0xf]
                  %1056 = vst [vmem:[%s922 + $0x108] sm:$0xf] %v1055
                  %v1057 = vld [vmem:[%s921 + $0x218] sm:$0xf]
                  %1058 = vst [vmem:[%s922 + $0x10c] sm:$0xf] %v1057
                  %v1059 = vld [vmem:[%s921 + $0x220] sm:$0xf]
                  %1060 = vst [vmem:[%s922 + $0x110] sm:$0xf] %v1059
                  %v1061 = vld [vmem:[%s921 + $0x228] sm:$0xf]
                  %1062 = vst [vmem:[%s922 + $0x114] sm:$0xf] %v1061
                  %v1063 = vld [vmem:[%s921 + $0x230] sm:$0xf]
                  %1064 = vst [vmem:[%s922 + $0x118] sm:$0xf] %v1063
                  %v1065 = vld [vmem:[%s921 + $0x238] sm:$0xf]
                  %1066 = vst [vmem:[%s922 + $0x11c] sm:$0xf] %v1065
                  %v1067 = vld [vmem:[%s921 + $0x240] sm:$0xf]
                  %1068 = vst [vmem:[%s922 + $0x120] sm:$0xf] %v1067
                  %v1069 = vld [vmem:[%s921 + $0x248] sm:$0xf]
                  %1070 = vst [vmem:[%s922 + $0x124] sm:$0xf] %v1069
                  %v1071 = vld [vmem:[%s921 + $0x250] sm:$0xf]
                  %1072 = vst [vmem:[%s922 + $0x128] sm:$0xf] %v1071
                  %v1073 = vld [vmem:[%s921 + $0x258] sm:$0xf]
                  %1074 = vst [vmem:[%s922 + $0x12c] sm:$0xf] %v1073
                  %v1075 = vld [vmem:[%s921 + $0x260] sm:$0xf]
                  %1076 = vst [vmem:[%s922 + $0x130] sm:$0xf] %v1075
                  %v1077 = vld [vmem:[%s921 + $0x268] sm:$0xf]
                  %1078 = vst [vmem:[%s922 + $0x134] sm:$0xf] %v1077
                  %v1079 = vld [vmem:[%s921 + $0x270] sm:$0xf]
                  %1080 = vst [vmem:[%s922 + $0x138] sm:$0xf] %v1079
                  %v1081 = vld [vmem:[%s921 + $0x278] sm:$0xf]
                  %1082 = vst [vmem:[%s922 + $0x13c] sm:$0xf] %v1081
                  %v1083 = vld [vmem:[%s921 + $0x280] sm:$0xf]
                  %1084 = vst [vmem:[%s922 + $0x140] sm:$0xf] %v1083
                  %v1085 = vld [vmem:[%s921 + $0x288] sm:$0xf]
                  %1086 = vst [vmem:[%s922 + $0x144] sm:$0xf] %v1085
                  %v1087 = vld [vmem:[%s921 + $0x290] sm:$0xf]
                  %1088 = vst [vmem:[%s922 + $0x148] sm:$0xf] %v1087
                  %v1089 = vld [vmem:[%s921 + $0x298] sm:$0xf]
                  %1090 = vst [vmem:[%s922 + $0x14c] sm:$0xf] %v1089
                  %v1091 = vld [vmem:[%s921 + $0x2a0] sm:$0xf]
                  %1092 = vst [vmem:[%s922 + $0x150] sm:$0xf] %v1091
                  %v1093 = vld [vmem:[%s921 + $0x2a8] sm:$0xf]
                  %1094 = vst [vmem:[%s922 + $0x154] sm:$0xf] %v1093
                  %v1095 = vld [vmem:[%s921 + $0x2b0] sm:$0xf]
                  %1096 = vst [vmem:[%s922 + $0x158] sm:$0xf] %v1095
                  %v1097 = vld [vmem:[%s921 + $0x2b8] sm:$0xf]
                  %1098 = vst [vmem:[%s922 + $0x15c] sm:$0xf] %v1097
                  %v1099 = vld [vmem:[%s921 + $0x2c0] sm:$0xf]
                  %1100 = vst [vmem:[%s922 + $0x160] sm:$0xf] %v1099
                  %v1101 = vld [vmem:[%s921 + $0x2c8] sm:$0xf]
                  %1102 = vst [vmem:[%s922 + $0x164] sm:$0xf] %v1101
                  %v1103 = vld [vmem:[%s921 + $0x2d0] sm:$0xf]
                  %1104 = vst [vmem:[%s922 + $0x168] sm:$0xf] %v1103
                  %v1105 = vld [vmem:[%s921 + $0x2d8] sm:$0xf]
                  %1106 = vst [vmem:[%s922 + $0x16c] sm:$0xf] %v1105
                  %v1107 = vld [vmem:[%s921 + $0x2e0] sm:$0xf]
                  %1108 = vst [vmem:[%s922 + $0x170] sm:$0xf] %v1107
                  %v1109 = vld [vmem:[%s921 + $0x2e8] sm:$0xf]
                  %1110 = vst [vmem:[%s922 + $0x174] sm:$0xf] %v1109
                  %v1111 = vld [vmem:[%s921 + $0x2f0] sm:$0xf]
                  %1112 = vst [vmem:[%s922 + $0x178] sm:$0xf] %v1111
                  %v1113 = vld [vmem:[%s921 + $0x2f8] sm:$0xf]
                  %1114 = vst [vmem:[%s922 + $0x17c] sm:$0xf] %v1113
                $region116: #{forward.1} parent=103 // loop_footer
                  %s920 = sadd.s32 1, %s916
                $region117: #{forward.1} parent=103 // loop_footer_branch
                  %915 = sbr.rel target = $region113
                $region118: #{forward.1} parent=103 // loop_exit
                  _
              $region104: #{forward.1} parent=88 // pred_fallthru
                _
            $region89: #{forward.1} parent=84 // pred_fallthru
              _
            // Predicated region
            $region90: #{forward.1} parent=84 // pred_check
              _
            $region91: #{forward.1} parent=84 // pred_check_branch
              %702 = sbr.rel (0) target = $region93
            $region92: #{forward.1} parent=84 // pred_region
              loop: start=0, step=1, limit=1
              $region94: #{forward.1} parent=92 // loop_pre_header
                _
              $region95: #{forward.1} parent=92 // loop_header
                %s705 = sphi 0, %s709
                %p706 = scmp.ge.s32.totalorder %s705, 1
                %s710 = sphi %s696, %s696
                %s711 = sphi %s694, %s694
              $region96: #{forward.1} parent=92 // loop_header_branch
                %708 = sbr.rel (%p706) target = $region100
              $region97: #{forward.1} parent=92 // loop_body
                %v712 = vld [vmem:[%s710] sm:$0xf]
                %713 = vst [vmem:[%s711] sm:$0xf] %v712
                %v714 = vld [vmem:[%s710 + $0x8] sm:$0xf]
                %715 = vst [vmem:[%s711 + $0x4] sm:$0xf] %v714
                %v716 = vld [vmem:[%s710 + $0x10] sm:$0xf]
                %717 = vst [vmem:[%s711 + $0x8] sm:$0xf] %v716
                %v718 = vld [vmem:[%s710 + $0x18] sm:$0xf]
                %719 = vst [vmem:[%s711 + $0xc] sm:$0xf] %v718
                %v720 = vld [vmem:[%s710 + $0x20] sm:$0xf]
                %721 = vst [vmem:[%s711 + $0x10] sm:$0xf] %v720
                %v722 = vld [vmem:[%s710 + $0x28] sm:$0xf]
                %723 = vst [vmem:[%s711 + $0x14] sm:$0xf] %v722
                %v724 = vld [vmem:[%s710 + $0x30] sm:$0xf]
                %725 = vst [vmem:[%s711 + $0x18] sm:$0xf] %v724
                %v726 = vld [vmem:[%s710 + $0x38] sm:$0xf]
                %727 = vst [vmem:[%s711 + $0x1c] sm:$0xf] %v726
                %v728 = vld [vmem:[%s710 + $0x40] sm:$0xf]
                %729 = vst [vmem:[%s711 + $0x20] sm:$0xf] %v728
                %v730 = vld [vmem:[%s710 + $0x48] sm:$0xf]
                %731 = vst [vmem:[%s711 + $0x24] sm:$0xf] %v730
                %v732 = vld [vmem:[%s710 + $0x50] sm:$0xf]
                %733 = vst [vmem:[%s711 + $0x28] sm:$0xf] %v732
                %v734 = vld [vmem:[%s710 + $0x58] sm:$0xf]
                %735 = vst [vmem:[%s711 + $0x2c] sm:$0xf] %v734
                %v736 = vld [vmem:[%s710 + $0x60] sm:$0xf]
                %737 = vst [vmem:[%s711 + $0x30] sm:$0xf] %v736
                %v738 = vld [vmem:[%s710 + $0x68] sm:$0xf]
                %739 = vst [vmem:[%s711 + $0x34] sm:$0xf] %v738
                %v740 = vld [vmem:[%s710 + $0x70] sm:$0xf]
                %741 = vst [vmem:[%s711 + $0x38] sm:$0xf] %v740
                %v742 = vld [vmem:[%s710 + $0x78] sm:$0xf]
                %743 = vst [vmem:[%s711 + $0x3c] sm:$0xf] %v742
                %v744 = vld [vmem:[%s710 + $0x80] sm:$0xf]
                %745 = vst [vmem:[%s711 + $0x40] sm:$0xf] %v744
                %v746 = vld [vmem:[%s710 + $0x88] sm:$0xf]
                %747 = vst [vmem:[%s711 + $0x44] sm:$0xf] %v746
                %v748 = vld [vmem:[%s710 + $0x90] sm:$0xf]
                %749 = vst [vmem:[%s711 + $0x48] sm:$0xf] %v748
                %v750 = vld [vmem:[%s710 + $0x98] sm:$0xf]
                %751 = vst [vmem:[%s711 + $0x4c] sm:$0xf] %v750
                %v752 = vld [vmem:[%s710 + $0xa0] sm:$0xf]
                %753 = vst [vmem:[%s711 + $0x50] sm:$0xf] %v752
                %v754 = vld [vmem:[%s710 + $0xa8] sm:$0xf]
                %755 = vst [vmem:[%s711 + $0x54] sm:$0xf] %v754
                %v756 = vld [vmem:[%s710 + $0xb0] sm:$0xf]
                %757 = vst [vmem:[%s711 + $0x58] sm:$0xf] %v756
                %v758 = vld [vmem:[%s710 + $0xb8] sm:$0xf]
                %759 = vst [vmem:[%s711 + $0x5c] sm:$0xf] %v758
                %v760 = vld [vmem:[%s710 + $0xc0] sm:$0xf]
                %761 = vst [vmem:[%s711 + $0x60] sm:$0xf] %v760
                %v762 = vld [vmem:[%s710 + $0xc8] sm:$0xf]
                %763 = vst [vmem:[%s711 + $0x64] sm:$0xf] %v762
                %v764 = vld [vmem:[%s710 + $0xd0] sm:$0xf]
                %765 = vst [vmem:[%s711 + $0x68] sm:$0xf] %v764
                %v766 = vld [vmem:[%s710 + $0xd8] sm:$0xf]
                %767 = vst [vmem:[%s711 + $0x6c] sm:$0xf] %v766
                %v768 = vld [vmem:[%s710 + $0xe0] sm:$0xf]
                %769 = vst [vmem:[%s711 + $0x70] sm:$0xf] %v768
                %v770 = vld [vmem:[%s710 + $0xe8] sm:$0xf]
                %771 = vst [vmem:[%s711 + $0x74] sm:$0xf] %v770
                %v772 = vld [vmem:[%s710 + $0xf0] sm:$0xf]
                %773 = vst [vmem:[%s711 + $0x78] sm:$0xf] %v772
                %v774 = vld [vmem:[%s710 + $0xf8] sm:$0xf]
                %775 = vst [vmem:[%s711 + $0x7c] sm:$0xf] %v774
                %v776 = vld [vmem:[%s710 + $0x100] sm:$0xf]
                %777 = vst [vmem:[%s711 + $0x80] sm:$0xf] %v776
                %v778 = vld [vmem:[%s710 + $0x108] sm:$0xf]
                %779 = vst [vmem:[%s711 + $0x84] sm:$0xf] %v778
                %v780 = vld [vmem:[%s710 + $0x110] sm:$0xf]
                %781 = vst [vmem:[%s711 + $0x88] sm:$0xf] %v780
                %v782 = vld [vmem:[%s710 + $0x118] sm:$0xf]
                %783 = vst [vmem:[%s711 + $0x8c] sm:$0xf] %v782
                %v784 = vld [vmem:[%s710 + $0x120] sm:$0xf]
                %785 = vst [vmem:[%s711 + $0x90] sm:$0xf] %v784
                %v786 = vld [vmem:[%s710 + $0x128] sm:$0xf]
                %787 = vst [vmem:[%s711 + $0x94] sm:$0xf] %v786
                %v788 = vld [vmem:[%s710 + $0x130] sm:$0xf]
                %789 = vst [vmem:[%s711 + $0x98] sm:$0xf] %v788
                %v790 = vld [vmem:[%s710 + $0x138] sm:$0xf]
                %791 = vst [vmem:[%s711 + $0x9c] sm:$0xf] %v790
                %v792 = vld [vmem:[%s710 + $0x140] sm:$0xf]
                %793 = vst [vmem:[%s711 + $0xa0] sm:$0xf] %v792
                %v794 = vld [vmem:[%s710 + $0x148] sm:$0xf]
                %795 = vst [vmem:[%s711 + $0xa4] sm:$0xf] %v794
                %v796 = vld [vmem:[%s710 + $0x150] sm:$0xf]
                %797 = vst [vmem:[%s711 + $0xa8] sm:$0xf] %v796
                %v798 = vld [vmem:[%s710 + $0x158] sm:$0xf]
                %799 = vst [vmem:[%s711 + $0xac] sm:$0xf] %v798
                %v800 = vld [vmem:[%s710 + $0x160] sm:$0xf]
                %801 = vst [vmem:[%s711 + $0xb0] sm:$0xf] %v800
                %v802 = vld [vmem:[%s710 + $0x168] sm:$0xf]
                %803 = vst [vmem:[%s711 + $0xb4] sm:$0xf] %v802
                %v804 = vld [vmem:[%s710 + $0x170] sm:$0xf]
                %805 = vst [vmem:[%s711 + $0xb8] sm:$0xf] %v804
                %v806 = vld [vmem:[%s710 + $0x178] sm:$0xf]
                %807 = vst [vmem:[%s711 + $0xbc] sm:$0xf] %v806
                %v808 = vld [vmem:[%s710 + $0x180] sm:$0xf]
                %809 = vst [vmem:[%s711 + $0xc0] sm:$0xf] %v808
                %v810 = vld [vmem:[%s710 + $0x188] sm:$0xf]
                %811 = vst [vmem:[%s711 + $0xc4] sm:$0xf] %v810
                %v812 = vld [vmem:[%s710 + $0x190] sm:$0xf]
                %813 = vst [vmem:[%s711 + $0xc8] sm:$0xf] %v812
                %v814 = vld [vmem:[%s710 + $0x198] sm:$0xf]
                %815 = vst [vmem:[%s711 + $0xcc] sm:$0xf] %v814
                %v816 = vld [vmem:[%s710 + $0x1a0] sm:$0xf]
                %817 = vst [vmem:[%s711 + $0xd0] sm:$0xf] %v816
                %v818 = vld [vmem:[%s710 + $0x1a8] sm:$0xf]
                %819 = vst [vmem:[%s711 + $0xd4] sm:$0xf] %v818
                %v820 = vld [vmem:[%s710 + $0x1b0] sm:$0xf]
                %821 = vst [vmem:[%s711 + $0xd8] sm:$0xf] %v820
                %v822 = vld [vmem:[%s710 + $0x1b8] sm:$0xf]
                %823 = vst [vmem:[%s711 + $0xdc] sm:$0xf] %v822
                %v824 = vld [vmem:[%s710 + $0x1c0] sm:$0xf]
                %825 = vst [vmem:[%s711 + $0xe0] sm:$0xf] %v824
                %v826 = vld [vmem:[%s710 + $0x1c8] sm:$0xf]
                %827 = vst [vmem:[%s711 + $0xe4] sm:$0xf] %v826
                %v828 = vld [vmem:[%s710 + $0x1d0] sm:$0xf]
                %829 = vst [vmem:[%s711 + $0xe8] sm:$0xf] %v828
                %v830 = vld [vmem:[%s710 + $0x1d8] sm:$0xf]
                %831 = vst [vmem:[%s711 + $0xec] sm:$0xf] %v830
                %v832 = vld [vmem:[%s710 + $0x1e0] sm:$0xf]
                %833 = vst [vmem:[%s711 + $0xf0] sm:$0xf] %v832
                %v834 = vld [vmem:[%s710 + $0x1e8] sm:$0xf]
                %835 = vst [vmem:[%s711 + $0xf4] sm:$0xf] %v834
                %v836 = vld [vmem:[%s710 + $0x1f0] sm:$0xf]
                %837 = vst [vmem:[%s711 + $0xf8] sm:$0xf] %v836
                %v838 = vld [vmem:[%s710 + $0x1f8] sm:$0xf]
                %839 = vst [vmem:[%s711 + $0xfc] sm:$0xf] %v838
                %v840 = vld [vmem:[%s710 + $0x200] sm:$0xf]
                %841 = vst [vmem:[%s711 + $0x100] sm:$0xf] %v840
                %v842 = vld [vmem:[%s710 + $0x208] sm:$0xf]
                %843 = vst [vmem:[%s711 + $0x104] sm:$0xf] %v842
                %v844 = vld [vmem:[%s710 + $0x210] sm:$0xf]
                %845 = vst [vmem:[%s711 + $0x108] sm:$0xf] %v844
                %v846 = vld [vmem:[%s710 + $0x218] sm:$0xf]
                %847 = vst [vmem:[%s711 + $0x10c] sm:$0xf] %v846
                %v848 = vld [vmem:[%s710 + $0x220] sm:$0xf]
                %849 = vst [vmem:[%s711 + $0x110] sm:$0xf] %v848
                %v850 = vld [vmem:[%s710 + $0x228] sm:$0xf]
                %851 = vst [vmem:[%s711 + $0x114] sm:$0xf] %v850
                %v852 = vld [vmem:[%s710 + $0x230] sm:$0xf]
                %853 = vst [vmem:[%s711 + $0x118] sm:$0xf] %v852
                %v854 = vld [vmem:[%s710 + $0x238] sm:$0xf]
                %855 = vst [vmem:[%s711 + $0x11c] sm:$0xf] %v854
                %v856 = vld [vmem:[%s710 + $0x240] sm:$0xf]
                %857 = vst [vmem:[%s711 + $0x120] sm:$0xf] %v856
                %v858 = vld [vmem:[%s710 + $0x248] sm:$0xf]
                %859 = vst [vmem:[%s711 + $0x124] sm:$0xf] %v858
                %v860 = vld [vmem:[%s710 + $0x250] sm:$0xf]
                %861 = vst [vmem:[%s711 + $0x128] sm:$0xf] %v860
                %v862 = vld [vmem:[%s710 + $0x258] sm:$0xf]
                %863 = vst [vmem:[%s711 + $0x12c] sm:$0xf] %v862
                %v864 = vld [vmem:[%s710 + $0x260] sm:$0xf]
                %865 = vst [vmem:[%s711 + $0x130] sm:$0xf] %v864
                %v866 = vld [vmem:[%s710 + $0x268] sm:$0xf]
                %867 = vst [vmem:[%s711 + $0x134] sm:$0xf] %v866
                %v868 = vld [vmem:[%s710 + $0x270] sm:$0xf]
                %869 = vst [vmem:[%s711 + $0x138] sm:$0xf] %v868
                %v870 = vld [vmem:[%s710 + $0x278] sm:$0xf]
                %871 = vst [vmem:[%s711 + $0x13c] sm:$0xf] %v870
                %v872 = vld [vmem:[%s710 + $0x280] sm:$0xf]
                %873 = vst [vmem:[%s711 + $0x140] sm:$0xf] %v872
                %v874 = vld [vmem:[%s710 + $0x288] sm:$0xf]
                %875 = vst [vmem:[%s711 + $0x144] sm:$0xf] %v874
                %v876 = vld [vmem:[%s710 + $0x290] sm:$0xf]
                %877 = vst [vmem:[%s711 + $0x148] sm:$0xf] %v876
                %v878 = vld [vmem:[%s710 + $0x298] sm:$0xf]
                %879 = vst [vmem:[%s711 + $0x14c] sm:$0xf] %v878
                %v880 = vld [vmem:[%s710 + $0x2a0] sm:$0xf]
                %881 = vst [vmem:[%s711 + $0x150] sm:$0xf] %v880
                %v882 = vld [vmem:[%s710 + $0x2a8] sm:$0xf]
                %883 = vst [vmem:[%s711 + $0x154] sm:$0xf] %v882
                %v884 = vld [vmem:[%s710 + $0x2b0] sm:$0xf]
                %885 = vst [vmem:[%s711 + $0x158] sm:$0xf] %v884
                %v886 = vld [vmem:[%s710 + $0x2b8] sm:$0xf]
                %887 = vst [vmem:[%s711 + $0x15c] sm:$0xf] %v886
                %v888 = vld [vmem:[%s710 + $0x2c0] sm:$0xf]
                %889 = vst [vmem:[%s711 + $0x160] sm:$0xf] %v888
                %v890 = vld [vmem:[%s710 + $0x2c8] sm:$0xf]
                %891 = vst [vmem:[%s711 + $0x164] sm:$0xf] %v890
                %v892 = vld [vmem:[%s710 + $0x2d0] sm:$0xf]
                %893 = vst [vmem:[%s711 + $0x168] sm:$0xf] %v892
                %v894 = vld [vmem:[%s710 + $0x2d8] sm:$0xf]
                %895 = vst [vmem:[%s711 + $0x16c] sm:$0xf] %v894
                %v896 = vld [vmem:[%s710 + $0x2e0] sm:$0xf]
                %897 = vst [vmem:[%s711 + $0x170] sm:$0xf] %v896
                %v898 = vld [vmem:[%s710 + $0x2e8] sm:$0xf]
                %899 = vst [vmem:[%s711 + $0x174] sm:$0xf] %v898
                %v900 = vld [vmem:[%s710 + $0x2f0] sm:$0xf]
                %901 = vst [vmem:[%s711 + $0x178] sm:$0xf] %v900
                %v902 = vld [vmem:[%s710 + $0x2f8] sm:$0xf]
                %903 = vst [vmem:[%s711 + $0x17c] sm:$0xf] %v902
              $region98: #{forward.1} parent=92 // loop_footer
                %s709 = sadd.s32 1, %s705
              $region99: #{forward.1} parent=92 // loop_footer_branch
                %704 = sbr.rel target = $region95
              $region100: #{forward.1} parent=92 // loop_exit
                _
            $region93: #{forward.1} parent=84 // pred_fallthru
              _
          $region85: #{forward.1} parent=80 // pred_fallthru
            _
          %1115 = vnop
        $region81: #{forward.1} parent=35 // pred_fallthru
          _
        // Predicated region
        $region119: #{forward.1} parent=35 // pred_check
          %p1116 = pneg %p89
        $region120: #{forward.1} parent=35 // pred_check_branch
          %1118 = sbr.rel (%p1116) target = $region122
        $region121: #{forward.1} parent=35 // pred_region
          %p1119 = scmp.lt.s32.totalorder %s17, 1
          %s1120 = scalar_select %p1119, %s17, 1
          %s1121 = scalar_lea.vmem %s2, %s1120
        $region122: #{forward.1} parent=35 // pred_fallthru
          _
      $region36: #{forward.1} parent=5 // pred_fallthru
        _
      %p1122 = scmp.le.s32.totalorder 1, %s17
      %p1123 = scmp.lt.s32.totalorder %s17, 3
      %p1124 = pnand %p1122, %p1123
      %p1125 = pneg %p1124
      // Predicated region
      $region123: #{forward.1} parent=5 // pred_check
        _
      $region124: #{forward.1} parent=5 // pred_check_branch
        %1127 = sbr.rel (%p1124) target = $region126
      $region125: #{forward.1} parent=5 // pred_region
        %s1128 = ssub.s32 %s17, 1
        %s1129 = sand.u32 %s30, 1
        %s1130 = sand.u32 %s30, 1
        %s1131 = smul.addr %s1130, 384
        %s1132 = scalar_lea.vmem [#allocation2], %s1131
        // Predicated region
        $region127: #{forward.1} parent=125 // pred_check
          %p1133 = pneg %p43
        $region128: #{forward.1} parent=125 // pred_check_branch
          %1135 = sbr.rel (%p1133) target = $region130
        $region129: #{forward.1} parent=125 // pred_region
          _
        $region130: #{forward.1} parent=125 // pred_fallthru
          _
        %s1136 = sand.u32 %s56, 1
        %s1137 = sand.u32 %s56, 1
        %s1138 = smul.addr %s1137, 384
        %s1139 = scalar_lea.vmem [#allocation3], %s1138
        // Predicated region
        $region131: #{forward.1} parent=125 // pred_check
          %p1140 = pneg %p69
        $region132: #{forward.1} parent=125 // pred_check_branch
          %1142 = sbr.rel (%p1140) target = $region134
        $region133: #{forward.1} parent=125 // pred_region
          _
        $region134: #{forward.1} parent=125 // pred_fallthru
          _
        %s1143 = sand.u32 %s30, 1
        %s1144 = sand.u32 %s30, 1
        %s1145 = smul.addr %s1144, 384
        %s1146 = scalar_lea.vmem [#allocation2], %s1145
        %p1147 = pneg %p43
        %p1148 = pneg %p40
        %s1149 = sand.u32 %s56, 1
        %s1150 = sand.u32 %s56, 1
        %s1151 = smul.addr %s1150, 384
        %s1152 = scalar_lea.vmem [#allocation3], %s1151
        %p1153 = pneg %p69
        %p1154 = pneg %p66
        %p1155 = scmp.lt.s32.totalorder %s22, 1
        %s1156 = scalar_select %p1155, %s22, 1
        %s1157 = scalar_lea.vmem %s2, %s1156
        %p1158 = pneg %p95
        %p1159 = pneg %p92
        %p1160 = pneg %p116
        %p1161 = pneg %p113
        %p1162 = pneg %p137
        %p1163 = pneg %p134
        %p1164 = pneg %p158
        %p1165 = pneg %p155
        %p1166 = pneg %p179
        %p1167 = pneg %p176
        %p1168 = pneg %p200
        %p1169 = pneg %p197
        %p1170 = pneg %p226
        %p1171 = pneg %p223
        %s1172 = sand.u32 %s213, 1
        %s1173 = scalar_lea.sflag [#allocation5], %s1172
        %s1174 = sand.u32 %s213, 1
        %s1175 = scalar_lea.vmem [#allocation4], %s1174
        %p1176 = scmp.lt.s32.totalorder %s22, 1
        %s1177 = scalar_select %p1176, %s22, 1
        %s1178 = scalar_lea.vmem %s2, %s1177
        %v1179 = vld [vmem:[%s1132] sm:$0xf]
        %v1180 = vld [vmem:[%s1132 + $0x4] sm:$0xf]
        %v1181 = vld [vmem:[%s1132 + $0x8] sm:$0xf]
        %v1182 = vld [vmem:[%s1132 + $0xc] sm:$0xf]
        %v1183 = vld [vmem:[%s1132 + $0x10] sm:$0xf]
        %v1184 = vld [vmem:[%s1132 + $0x14] sm:$0xf]
        %v1185 = vld [vmem:[%s1132 + $0x18] sm:$0xf]
        %v1186 = vld [vmem:[%s1132 + $0x1c] sm:$0xf]
        %v1187 = vld [vmem:[%s1132 + $0x20] sm:$0xf]
        %v1188 = vld [vmem:[%s1132 + $0x24] sm:$0xf]
        %v1189 = vld [vmem:[%s1132 + $0x28] sm:$0xf]
        %v1190 = vld [vmem:[%s1132 + $0x2c] sm:$0xf]
        %v1191 = vld [vmem:[%s1132 + $0x30] sm:$0xf]
        %v1192 = vld [vmem:[%s1132 + $0x34] sm:$0xf]
        %v1193 = vld [vmem:[%s1132 + $0x38] sm:$0xf]
        %v1194 = vld [vmem:[%s1132 + $0x3c] sm:$0xf]
        %v1195 = vld [vmem:[%s1132 + $0x40] sm:$0xf]
        %v1196 = vld [vmem:[%s1132 + $0x44] sm:$0xf]
        %v1197 = vld [vmem:[%s1132 + $0x48] sm:$0xf]
        %v1198 = vld [vmem:[%s1132 + $0x4c] sm:$0xf]
        %v1199 = vld [vmem:[%s1132 + $0x50] sm:$0xf]
        %v1200 = vld [vmem:[%s1132 + $0x54] sm:$0xf]
        %v1201 = vld [vmem:[%s1132 + $0x58] sm:$0xf]
        %v1202 = vld [vmem:[%s1132 + $0x5c] sm:$0xf]
        %v1203 = vld [vmem:[%s1132 + $0x60] sm:$0xf]
        %v1204 = vld [vmem:[%s1132 + $0x64] sm:$0xf]
        %v1205 = vld [vmem:[%s1132 + $0x68] sm:$0xf]
        %v1206 = vld [vmem:[%s1132 + $0x6c] sm:$0xf]
        %v1207 = vld [vmem:[%s1132 + $0x70] sm:$0xf]
        %v1208 = vld [vmem:[%s1132 + $0x74] sm:$0xf]
        %v1209 = vld [vmem:[%s1132 + $0x78] sm:$0xf]
        %v1210 = vld [vmem:[%s1132 + $0x7c] sm:$0xf]
        %v1211 = vld [vmem:[%s1132 + $0x80] sm:$0xf]
        %v1212 = vld [vmem:[%s1132 + $0x84] sm:$0xf]
        %v1213 = vld [vmem:[%s1132 + $0x88] sm:$0xf]
        %v1214 = vld [vmem:[%s1132 + $0x8c] sm:$0xf]
        %v1215 = vld [vmem:[%s1132 + $0x90] sm:$0xf]
        %v1216 = vld [vmem:[%s1132 + $0x94] sm:$0xf]
        %v1217 = vld [vmem:[%s1132 + $0x98] sm:$0xf]
        %v1218 = vld [vmem:[%s1132 + $0x9c] sm:$0xf]
        %v1219 = vld [vmem:[%s1132 + $0xa0] sm:$0xf]
        %v1220 = vld [vmem:[%s1132 + $0xa4] sm:$0xf]
        %v1221 = vld [vmem:[%s1132 + $0xa8] sm:$0xf]
        %v1222 = vld [vmem:[%s1132 + $0xac] sm:$0xf]
        %v1223 = vld [vmem:[%s1132 + $0xb0] sm:$0xf]
        %v1224 = vld [vmem:[%s1132 + $0xb4] sm:$0xf]
        %v1225 = vld [vmem:[%s1132 + $0xb8] sm:$0xf]
        %v1226 = vld [vmem:[%s1132 + $0xbc] sm:$0xf]
        %v1227 = vld [vmem:[%s1132 + $0xc0] sm:$0xf]
        %v1228 = vld [vmem:[%s1132 + $0xc4] sm:$0xf]
        %v1229 = vld [vmem:[%s1132 + $0xc8] sm:$0xf]
        %v1230 = vld [vmem:[%s1132 + $0xcc] sm:$0xf]
        %v1231 = vld [vmem:[%s1132 + $0xd0] sm:$0xf]
        %v1232 = vld [vmem:[%s1132 + $0xd4] sm:$0xf]
        %v1233 = vld [vmem:[%s1132 + $0xd8] sm:$0xf]
        %v1234 = vld [vmem:[%s1132 + $0xdc] sm:$0xf]
        %v1235 = vld [vmem:[%s1132 + $0xe0] sm:$0xf]
        %v1236 = vld [vmem:[%s1132 + $0xe4] sm:$0xf]
        %v1237 = vld [vmem:[%s1132 + $0xe8] sm:$0xf]
        %v1238 = vld [vmem:[%s1132 + $0xec] sm:$0xf]
        %v1239 = vld [vmem:[%s1132 + $0xf0] sm:$0xf]
        %v1240 = vld [vmem:[%s1132 + $0xf4] sm:$0xf]
        %v1241 = vld [vmem:[%s1132 + $0xf8] sm:$0xf]
        %v1242 = vld [vmem:[%s1132 + $0xfc] sm:$0xf]
        %v1243 = vld [vmem:[%s1132 + $0x100] sm:$0xf]
        %v1244 = vld [vmem:[%s1132 + $0x104] sm:$0xf]
        %v1245 = vld [vmem:[%s1132 + $0x108] sm:$0xf]
        %v1246 = vld [vmem:[%s1132 + $0x10c] sm:$0xf]
        %v1247 = vld [vmem:[%s1132 + $0x110] sm:$0xf]
        %v1248 = vld [vmem:[%s1132 + $0x114] sm:$0xf]
        %v1249 = vld [vmem:[%s1132 + $0x118] sm:$0xf]
        %v1250 = vld [vmem:[%s1132 + $0x11c] sm:$0xf]
        %v1251 = vld [vmem:[%s1132 + $0x120] sm:$0xf]
        %v1252 = vld [vmem:[%s1132 + $0x124] sm:$0xf]
        %v1253 = vld [vmem:[%s1132 + $0x128] sm:$0xf]
        %v1254 = vld [vmem:[%s1132 + $0x12c] sm:$0xf]
        %v1255 = vld [vmem:[%s1132 + $0x130] sm:$0xf]
        %v1256 = vld [vmem:[%s1132 + $0x134] sm:$0xf]
        %v1257 = vld [vmem:[%s1132 + $0x138] sm:$0xf]
        %v1258 = vld [vmem:[%s1132 + $0x13c] sm:$0xf]
        %v1259 = vld [vmem:[%s1132 + $0x140] sm:$0xf]
        %v1260 = vld [vmem:[%s1132 + $0x144] sm:$0xf]
        %v1261 = vld [vmem:[%s1132 + $0x148] sm:$0xf]
        %v1262 = vld [vmem:[%s1132 + $0x14c] sm:$0xf]
        %v1263 = vld [vmem:[%s1132 + $0x150] sm:$0xf]
        %v1264 = vld [vmem:[%s1132 + $0x154] sm:$0xf]
        %v1265 = vld [vmem:[%s1132 + $0x158] sm:$0xf]
        %v1266 = vld [vmem:[%s1132 + $0x15c] sm:$0xf]
        %v1267 = vld [vmem:[%s1132 + $0x160] sm:$0xf]
        %v1268 = vld [vmem:[%s1132 + $0x164] sm:$0xf]
        %v1269 = vld [vmem:[%s1132 + $0x168] sm:$0xf]
        %v1270 = vld [vmem:[%s1132 + $0x16c] sm:$0xf]
        %v1271 = vld [vmem:[%s1132 + $0x170] sm:$0xf]
        %v1272 = vld [vmem:[%s1132 + $0x174] sm:$0xf]
        %v1273 = vld [vmem:[%s1132 + $0x178] sm:$0xf]
        %v1274 = vld [vmem:[%s1132 + $0x17c] sm:$0xf]
        %v1275 = vunpack.c.l.bf16 %v1179
        %v1276 = vunpack.c.l.bf16 %v1180
        %v1277 = vunpack.c.l.bf16 %v1181
        %v1278 = vunpack.c.l.bf16 %v1182
        %v1279 = vunpack.c.l.bf16 %v1183
        %v1280 = vunpack.c.l.bf16 %v1184
        %v1281 = vunpack.c.l.bf16 %v1185
        %v1282 = vunpack.c.l.bf16 %v1186
        %v1283 = vunpack.c.l.bf16 %v1187
        %v1284 = vunpack.c.l.bf16 %v1188
        %v1285 = vunpack.c.l.bf16 %v1189
        %v1286 = vunpack.c.l.bf16 %v1190
        %v1287 = vunpack.c.l.bf16 %v1191
        %v1288 = vunpack.c.l.bf16 %v1192
        %v1289 = vunpack.c.l.bf16 %v1193
        %v1290 = vunpack.c.l.bf16 %v1194
        %v1291 = vunpack.c.l.bf16 %v1195
        %v1292 = vunpack.c.l.bf16 %v1196
        %v1293 = vunpack.c.l.bf16 %v1197
        %v1294 = vunpack.c.l.bf16 %v1198
        %v1295 = vunpack.c.l.bf16 %v1199
        %v1296 = vunpack.c.l.bf16 %v1200
        %v1297 = vunpack.c.l.bf16 %v1201
        %v1298 = vunpack.c.l.bf16 %v1202
        %v1299 = vunpack.c.l.bf16 %v1203
        %v1300 = vunpack.c.l.bf16 %v1204
        %v1301 = vunpack.c.l.bf16 %v1205
        %v1302 = vunpack.c.l.bf16 %v1206
        %v1303 = vunpack.c.l.bf16 %v1207
        %v1304 = vunpack.c.l.bf16 %v1208
        %v1305 = vunpack.c.l.bf16 %v1209
        %v1306 = vunpack.c.l.bf16 %v1210
        %v1307 = vunpack.c.l.bf16 %v1211
        %v1308 = vunpack.c.l.bf16 %v1212
        %v1309 = vunpack.c.l.bf16 %v1213
        %v1310 = vunpack.c.l.bf16 %v1214
        %v1311 = vunpack.c.l.bf16 %v1215
        %v1312 = vunpack.c.l.bf16 %v1216
        %v1313 = vunpack.c.l.bf16 %v1217
        %v1314 = vunpack.c.l.bf16 %v1218
        %v1315 = vunpack.c.l.bf16 %v1219
        %v1316 = vunpack.c.l.bf16 %v1220
        %v1317 = vunpack.c.l.bf16 %v1221
        %v1318 = vunpack.c.l.bf16 %v1222
        %v1319 = vunpack.c.l.bf16 %v1223
        %v1320 = vunpack.c.l.bf16 %v1224
        %v1321 = vunpack.c.l.bf16 %v1225
        %v1322 = vunpack.c.l.bf16 %v1226
        %v1323 = vunpack.c.l.bf16 %v1227
        %v1324 = vunpack.c.l.bf16 %v1228
        %v1325 = vunpack.c.l.bf16 %v1229
        %v1326 = vunpack.c.l.bf16 %v1230
        %v1327 = vunpack.c.l.bf16 %v1231
        %v1328 = vunpack.c.l.bf16 %v1232
        %v1329 = vunpack.c.l.bf16 %v1233
        %v1330 = vunpack.c.l.bf16 %v1234
        %v1331 = vunpack.c.l.bf16 %v1235
        %v1332 = vunpack.c.l.bf16 %v1236
        %v1333 = vunpack.c.l.bf16 %v1237
        %v1334 = vunpack.c.l.bf16 %v1238
        %v1335 = vunpack.c.l.bf16 %v1239
        %v1336 = vunpack.c.l.bf16 %v1240
        %v1337 = vunpack.c.l.bf16 %v1241
        %v1338 = vunpack.c.l.bf16 %v1242
        %v1339 = vunpack.c.l.bf16 %v1243
        %v1340 = vunpack.c.l.bf16 %v1244
        %v1341 = vunpack.c.l.bf16 %v1245
        %v1342 = vunpack.c.l.bf16 %v1246
        %v1343 = vunpack.c.l.bf16 %v1247
        %v1344 = vunpack.c.l.bf16 %v1248
        %v1345 = vunpack.c.l.bf16 %v1249
        %v1346 = vunpack.c.l.bf16 %v1250
        %v1347 = vunpack.c.l.bf16 %v1251
        %v1348 = vunpack.c.l.bf16 %v1252
        %v1349 = vunpack.c.l.bf16 %v1253
        %v1350 = vunpack.c.l.bf16 %v1254
        %v1351 = vunpack.c.l.bf16 %v1255
        %v1352 = vunpack.c.l.bf16 %v1256
        %v1353 = vunpack.c.l.bf16 %v1257
        %v1354 = vunpack.c.l.bf16 %v1258
        %v1355 = vunpack.c.l.bf16 %v1259
        %v1356 = vunpack.c.l.bf16 %v1260
        %v1357 = vunpack.c.l.bf16 %v1261
        %v1358 = vunpack.c.l.bf16 %v1262
        %v1359 = vunpack.c.l.bf16 %v1263
        %v1360 = vunpack.c.l.bf16 %v1264
        %v1361 = vunpack.c.l.bf16 %v1265
        %v1362 = vunpack.c.l.bf16 %v1266
        %v1363 = vunpack.c.l.bf16 %v1267
        %v1364 = vunpack.c.l.bf16 %v1268
        %v1365 = vunpack.c.l.bf16 %v1269
        %v1366 = vunpack.c.l.bf16 %v1270
        %v1367 = vunpack.c.l.bf16 %v1271
        %v1368 = vunpack.c.l.bf16 %v1272
        %v1369 = vunpack.c.l.bf16 %v1273
        %v1370 = vunpack.c.l.bf16 %v1274
        %v1371 = vld [vmem:[%s1139] sm:$0xf]
        %v1372 = vld [vmem:[%s1139 + $0x4] sm:$0xf]
        %v1373 = vld [vmem:[%s1139 + $0x8] sm:$0xf]
        %v1374 = vld [vmem:[%s1139 + $0xc] sm:$0xf]
        %v1375 = vld [vmem:[%s1139 + $0x10] sm:$0xf]
        %v1376 = vld [vmem:[%s1139 + $0x14] sm:$0xf]
        %v1377 = vld [vmem:[%s1139 + $0x18] sm:$0xf]
        %v1378 = vld [vmem:[%s1139 + $0x1c] sm:$0xf]
        %v1379 = vld [vmem:[%s1139 + $0x20] sm:$0xf]
        %v1380 = vld [vmem:[%s1139 + $0x24] sm:$0xf]
        %v1381 = vld [vmem:[%s1139 + $0x28] sm:$0xf]
        %v1382 = vld [vmem:[%s1139 + $0x2c] sm:$0xf]
        %v1383 = vld [vmem:[%s1139 + $0x30] sm:$0xf]
        %v1384 = vld [vmem:[%s1139 + $0x34] sm:$0xf]
        %v1385 = vld [vmem:[%s1139 + $0x38] sm:$0xf]
        %v1386 = vld [vmem:[%s1139 + $0x3c] sm:$0xf]
        %v1387 = vld [vmem:[%s1139 + $0x40] sm:$0xf]
        %v1388 = vld [vmem:[%s1139 + $0x44] sm:$0xf]
        %v1389 = vld [vmem:[%s1139 + $0x48] sm:$0xf]
        %v1390 = vld [vmem:[%s1139 + $0x4c] sm:$0xf]
        %v1391 = vld [vmem:[%s1139 + $0x50] sm:$0xf]
        %v1392 = vld [vmem:[%s1139 + $0x54] sm:$0xf]
        %v1393 = vld [vmem:[%s1139 + $0x58] sm:$0xf]
        %v1394 = vld [vmem:[%s1139 + $0x5c] sm:$0xf]
        %v1395 = vld [vmem:[%s1139 + $0x60] sm:$0xf]
        %v1396 = vld [vmem:[%s1139 + $0x64] sm:$0xf]
        %v1397 = vld [vmem:[%s1139 + $0x68] sm:$0xf]
        %v1398 = vld [vmem:[%s1139 + $0x6c] sm:$0xf]
        %v1399 = vld [vmem:[%s1139 + $0x70] sm:$0xf]
        %v1400 = vld [vmem:[%s1139 + $0x74] sm:$0xf]
        %v1401 = vld [vmem:[%s1139 + $0x78] sm:$0xf]
        %v1402 = vld [vmem:[%s1139 + $0x7c] sm:$0xf]
        %v1403 = vld [vmem:[%s1139 + $0x80] sm:$0xf]
        %v1404 = vld [vmem:[%s1139 + $0x84] sm:$0xf]
        %v1405 = vld [vmem:[%s1139 + $0x88] sm:$0xf]
        %v1406 = vld [vmem:[%s1139 + $0x8c] sm:$0xf]
        %v1407 = vld [vmem:[%s1139 + $0x90] sm:$0xf]
        %v1408 = vld [vmem:[%s1139 + $0x94] sm:$0xf]
        %v1409 = vld [vmem:[%s1139 + $0x98] sm:$0xf]
        %v1410 = vld [vmem:[%s1139 + $0x9c] sm:$0xf]
        %v1411 = vld [vmem:[%s1139 + $0xa0] sm:$0xf]
        %v1412 = vld [vmem:[%s1139 + $0xa4] sm:$0xf]
        %v1413 = vld [vmem:[%s1139 + $0xa8] sm:$0xf]
        %v1414 = vld [vmem:[%s1139 + $0xac] sm:$0xf]
        %v1415 = vld [vmem:[%s1139 + $0xb0] sm:$0xf]
        %v1416 = vld [vmem:[%s1139 + $0xb4] sm:$0xf]
        %v1417 = vld [vmem:[%s1139 + $0xb8] sm:$0xf]
        %v1418 = vld [vmem:[%s1139 + $0xbc] sm:$0xf]
        %v1419 = vld [vmem:[%s1139 + $0xc0] sm:$0xf]
        %v1420 = vld [vmem:[%s1139 + $0xc4] sm:$0xf]
        %v1421 = vld [vmem:[%s1139 + $0xc8] sm:$0xf]
        %v1422 = vld [vmem:[%s1139 + $0xcc] sm:$0xf]
        %v1423 = vld [vmem:[%s1139 + $0xd0] sm:$0xf]
        %v1424 = vld [vmem:[%s1139 + $0xd4] sm:$0xf]
        %v1425 = vld [vmem:[%s1139 + $0xd8] sm:$0xf]
        %v1426 = vld [vmem:[%s1139 + $0xdc] sm:$0xf]
        %v1427 = vld [vmem:[%s1139 + $0xe0] sm:$0xf]
        %v1428 = vld [vmem:[%s1139 + $0xe4] sm:$0xf]
        %v1429 = vld [vmem:[%s1139 + $0xe8] sm:$0xf]
        %v1430 = vld [vmem:[%s1139 + $0xec] sm:$0xf]
        %v1431 = vld [vmem:[%s1139 + $0xf0] sm:$0xf]
        %v1432 = vld [vmem:[%s1139 + $0xf4] sm:$0xf]
        %v1433 = vld [vmem:[%s1139 + $0xf8] sm:$0xf]
        %v1434 = vld [vmem:[%s1139 + $0xfc] sm:$0xf]
        %v1435 = vld [vmem:[%s1139 + $0x100] sm:$0xf]
        %v1436 = vld [vmem:[%s1139 + $0x104] sm:$0xf]
        %v1437 = vld [vmem:[%s1139 + $0x108] sm:$0xf]
        %v1438 = vld [vmem:[%s1139 + $0x10c] sm:$0xf]
        %v1439 = vld [vmem:[%s1139 + $0x110] sm:$0xf]
        %v1440 = vld [vmem:[%s1139 + $0x114] sm:$0xf]
        %v1441 = vld [vmem:[%s1139 + $0x118] sm:$0xf]
        %v1442 = vld [vmem:[%s1139 + $0x11c] sm:$0xf]
        %v1443 = vld [vmem:[%s1139 + $0x120] sm:$0xf]
        %v1444 = vld [vmem:[%s1139 + $0x124] sm:$0xf]
        %v1445 = vld [vmem:[%s1139 + $0x128] sm:$0xf]
        %v1446 = vld [vmem:[%s1139 + $0x12c] sm:$0xf]
        %v1447 = vld [vmem:[%s1139 + $0x130] sm:$0xf]
        %v1448 = vld [vmem:[%s1139 + $0x134] sm:$0xf]
        %v1449 = vld [vmem:[%s1139 + $0x138] sm:$0xf]
        %v1450 = vld [vmem:[%s1139 + $0x13c] sm:$0xf]
        %v1451 = vld [vmem:[%s1139 + $0x140] sm:$0xf]
        %v1452 = vld [vmem:[%s1139 + $0x144] sm:$0xf]
        %v1453 = vld [vmem:[%s1139 + $0x148] sm:$0xf]
        %v1454 = vld [vmem:[%s1139 + $0x14c] sm:$0xf]
        %v1455 = vld [vmem:[%s1139 + $0x150] sm:$0xf]
        %v1456 = vld [vmem:[%s1139 + $0x154] sm:$0xf]
        %v1457 = vld [vmem:[%s1139 + $0x158] sm:$0xf]
        %v1458 = vld [vmem:[%s1139 + $0x15c] sm:$0xf]
        %v1459 = vld [vmem:[%s1139 + $0x160] sm:$0xf]
        %v1460 = vld [vmem:[%s1139 + $0x164] sm:$0xf]
        %v1461 = vld [vmem:[%s1139 + $0x168] sm:$0xf]
        %v1462 = vld [vmem:[%s1139 + $0x16c] sm:$0xf]
        %v1463 = vld [vmem:[%s1139 + $0x170] sm:$0xf]
        %v1464 = vld [vmem:[%s1139 + $0x174] sm:$0xf]
        %v1465 = vld [vmem:[%s1139 + $0x178] sm:$0xf]
        %v1466 = vld [vmem:[%s1139 + $0x17c] sm:$0xf]
        %v1467 = vunpack.c.l.bf16 %v1371
        %v1468 = vunpack.c.l.bf16 %v1372
        %v1469 = vunpack.c.l.bf16 %v1373
        %v1470 = vunpack.c.l.bf16 %v1374
        %v1471 = vunpack.c.l.bf16 %v1375
        %v1472 = vunpack.c.l.bf16 %v1376
        %v1473 = vunpack.c.l.bf16 %v1377
        %v1474 = vunpack.c.l.bf16 %v1378
        %v1475 = vunpack.c.l.bf16 %v1379
        %v1476 = vunpack.c.l.bf16 %v1380
        %v1477 = vunpack.c.l.bf16 %v1381
        %v1478 = vunpack.c.l.bf16 %v1382
        %v1479 = vunpack.c.l.bf16 %v1383
        %v1480 = vunpack.c.l.bf16 %v1384
        %v1481 = vunpack.c.l.bf16 %v1385
        %v1482 = vunpack.c.l.bf16 %v1386
        %v1483 = vunpack.c.l.bf16 %v1387
        %v1484 = vunpack.c.l.bf16 %v1388
        %v1485 = vunpack.c.l.bf16 %v1389
        %v1486 = vunpack.c.l.bf16 %v1390
        %v1487 = vunpack.c.l.bf16 %v1391
        %v1488 = vunpack.c.l.bf16 %v1392
        %v1489 = vunpack.c.l.bf16 %v1393
        %v1490 = vunpack.c.l.bf16 %v1394
        %v1491 = vunpack.c.l.bf16 %v1395
        %v1492 = vunpack.c.l.bf16 %v1396
        %v1493 = vunpack.c.l.bf16 %v1397
        %v1494 = vunpack.c.l.bf16 %v1398
        %v1495 = vunpack.c.l.bf16 %v1399
        %v1496 = vunpack.c.l.bf16 %v1400
        %v1497 = vunpack.c.l.bf16 %v1401
        %v1498 = vunpack.c.l.bf16 %v1402
        %v1499 = vunpack.c.l.bf16 %v1403
        %v1500 = vunpack.c.l.bf16 %v1404
        %v1501 = vunpack.c.l.bf16 %v1405
        %v1502 = vunpack.c.l.bf16 %v1406
        %v1503 = vunpack.c.l.bf16 %v1407
        %v1504 = vunpack.c.l.bf16 %v1408
        %v1505 = vunpack.c.l.bf16 %v1409
        %v1506 = vunpack.c.l.bf16 %v1410
        %v1507 = vunpack.c.l.bf16 %v1411
        %v1508 = vunpack.c.l.bf16 %v1412
        %v1509 = vunpack.c.l.bf16 %v1413
        %v1510 = vunpack.c.l.bf16 %v1414
        %v1511 = vunpack.c.l.bf16 %v1415
        %v1512 = vunpack.c.l.bf16 %v1416
        %v1513 = vunpack.c.l.bf16 %v1417
        %v1514 = vunpack.c.l.bf16 %v1418
        %v1515 = vunpack.c.l.bf16 %v1419
        %v1516 = vunpack.c.l.bf16 %v1420
        %v1517 = vunpack.c.l.bf16 %v1421
        %v1518 = vunpack.c.l.bf16 %v1422
        %v1519 = vunpack.c.l.bf16 %v1423
        %v1520 = vunpack.c.l.bf16 %v1424
        %v1521 = vunpack.c.l.bf16 %v1425
        %v1522 = vunpack.c.l.bf16 %v1426
        %v1523 = vunpack.c.l.bf16 %v1427
        %v1524 = vunpack.c.l.bf16 %v1428
        %v1525 = vunpack.c.l.bf16 %v1429
        %v1526 = vunpack.c.l.bf16 %v1430
        %v1527 = vunpack.c.l.bf16 %v1431
        %v1528 = vunpack.c.l.bf16 %v1432
        %v1529 = vunpack.c.l.bf16 %v1433
        %v1530 = vunpack.c.l.bf16 %v1434
        %v1531 = vunpack.c.l.bf16 %v1435
        %v1532 = vunpack.c.l.bf16 %v1436
        %v1533 = vunpack.c.l.bf16 %v1437
        %v1534 = vunpack.c.l.bf16 %v1438
        %v1535 = vunpack.c.l.bf16 %v1439
        %v1536 = vunpack.c.l.bf16 %v1440
        %v1537 = vunpack.c.l.bf16 %v1441
        %v1538 = vunpack.c.l.bf16 %v1442
        %v1539 = vunpack.c.l.bf16 %v1443
        %v1540 = vunpack.c.l.bf16 %v1444
        %v1541 = vunpack.c.l.bf16 %v1445
        %v1542 = vunpack.c.l.bf16 %v1446
        %v1543 = vunpack.c.l.bf16 %v1447
        %v1544 = vunpack.c.l.bf16 %v1448
        %v1545 = vunpack.c.l.bf16 %v1449
        %v1546 = vunpack.c.l.bf16 %v1450
        %v1547 = vunpack.c.l.bf16 %v1451
        %v1548 = vunpack.c.l.bf16 %v1452
        %v1549 = vunpack.c.l.bf16 %v1453
        %v1550 = vunpack.c.l.bf16 %v1454
        %v1551 = vunpack.c.l.bf16 %v1455
        %v1552 = vunpack.c.l.bf16 %v1456
        %v1553 = vunpack.c.l.bf16 %v1457
        %v1554 = vunpack.c.l.bf16 %v1458
        %v1555 = vunpack.c.l.bf16 %v1459
        %v1556 = vunpack.c.l.bf16 %v1460
        %v1557 = vunpack.c.l.bf16 %v1461
        %v1558 = vunpack.c.l.bf16 %v1462
        %v1559 = vunpack.c.l.bf16 %v1463
        %v1560 = vunpack.c.l.bf16 %v1464
        %v1561 = vunpack.c.l.bf16 %v1465
        %v1562 = vunpack.c.l.bf16 %v1466
        %v1563 = vmul.f32 %v1275, %v1467
        %v1564 = vmul.f32 %v1276, %v1468
        %v1565 = vmul.f32 %v1277, %v1469
        %v1566 = vmul.f32 %v1278, %v1470
        %v1567 = vmul.f32 %v1279, %v1471
        %v1568 = vmul.f32 %v1280, %v1472
        %v1569 = vmul.f32 %v1281, %v1473
        %v1570 = vmul.f32 %v1282, %v1474
        %v1571 = vmul.f32 %v1283, %v1475
        %v1572 = vmul.f32 %v1284, %v1476
        %v1573 = vmul.f32 %v1285, %v1477
        %v1574 = vmul.f32 %v1286, %v1478
        %v1575 = vmul.f32 %v1287, %v1479
        %v1576 = vmul.f32 %v1288, %v1480
        %v1577 = vmul.f32 %v1289, %v1481
        %v1578 = vmul.f32 %v1290, %v1482
        %v1579 = vmul.f32 %v1291, %v1483
        %v1580 = vmul.f32 %v1292, %v1484
        %v1581 = vmul.f32 %v1293, %v1485
        %v1582 = vmul.f32 %v1294, %v1486
        %v1583 = vmul.f32 %v1295, %v1487
        %v1584 = vmul.f32 %v1296, %v1488
        %v1585 = vmul.f32 %v1297, %v1489
        %v1586 = vmul.f32 %v1298, %v1490
        %v1587 = vmul.f32 %v1299, %v1491
        %v1588 = vmul.f32 %v1300, %v1492
        %v1589 = vmul.f32 %v1301, %v1493
        %v1590 = vmul.f32 %v1302, %v1494
        %v1591 = vmul.f32 %v1303, %v1495
        %v1592 = vmul.f32 %v1304, %v1496
        %v1593 = vmul.f32 %v1305, %v1497
        %v1594 = vmul.f32 %v1306, %v1498
        %v1595 = vmul.f32 %v1307, %v1499
        %v1596 = vmul.f32 %v1308, %v1500
        %v1597 = vmul.f32 %v1309, %v1501
        %v1598 = vmul.f32 %v1310, %v1502
        %v1599 = vmul.f32 %v1311, %v1503
        %v1600 = vmul.f32 %v1312, %v1504
        %v1601 = vmul.f32 %v1313, %v1505
        %v1602 = vmul.f32 %v1314, %v1506
        %v1603 = vmul.f32 %v1315, %v1507
        %v1604 = vmul.f32 %v1316, %v1508
        %v1605 = vmul.f32 %v1317, %v1509
        %v1606 = vmul.f32 %v1318, %v1510
        %v1607 = vmul.f32 %v1319, %v1511
        %v1608 = vmul.f32 %v1320, %v1512
        %v1609 = vmul.f32 %v1321, %v1513
        %v1610 = vmul.f32 %v1322, %v1514
        %v1611 = vmul.f32 %v1323, %v1515
        %v1612 = vmul.f32 %v1324, %v1516
        %v1613 = vmul.f32 %v1325, %v1517
        %v1614 = vmul.f32 %v1326, %v1518
        %v1615 = vmul.f32 %v1327, %v1519
        %v1616 = vmul.f32 %v1328, %v1520
        %v1617 = vmul.f32 %v1329, %v1521
        %v1618 = vmul.f32 %v1330, %v1522
        %v1619 = vmul.f32 %v1331, %v1523
        %v1620 = vmul.f32 %v1332, %v1524
        %v1621 = vmul.f32 %v1333, %v1525
        %v1622 = vmul.f32 %v1334, %v1526
        %v1623 = vmul.f32 %v1335, %v1527
        %v1624 = vmul.f32 %v1336, %v1528
        %v1625 = vmul.f32 %v1337, %v1529
        %v1626 = vmul.f32 %v1338, %v1530
        %v1627 = vmul.f32 %v1339, %v1531
        %v1628 = vmul.f32 %v1340, %v1532
        %v1629 = vmul.f32 %v1341, %v1533
        %v1630 = vmul.f32 %v1342, %v1534
        %v1631 = vmul.f32 %v1343, %v1535
        %v1632 = vmul.f32 %v1344, %v1536
        %v1633 = vmul.f32 %v1345, %v1537
        %v1634 = vmul.f32 %v1346, %v1538
        %v1635 = vmul.f32 %v1347, %v1539
        %v1636 = vmul.f32 %v1348, %v1540
        %v1637 = vmul.f32 %v1349, %v1541
        %v1638 = vmul.f32 %v1350, %v1542
        %v1639 = vmul.f32 %v1351, %v1543
        %v1640 = vmul.f32 %v1352, %v1544
        %v1641 = vmul.f32 %v1353, %v1545
        %v1642 = vmul.f32 %v1354, %v1546
        %v1643 = vmul.f32 %v1355, %v1547
        %v1644 = vmul.f32 %v1356, %v1548
        %v1645 = vmul.f32 %v1357, %v1549
        %v1646 = vmul.f32 %v1358, %v1550
        %v1647 = vmul.f32 %v1359, %v1551
        %v1648 = vmul.f32 %v1360, %v1552
        %v1649 = vmul.f32 %v1361, %v1553
        %v1650 = vmul.f32 %v1362, %v1554
        %v1651 = vmul.f32 %v1363, %v1555
        %v1652 = vmul.f32 %v1364, %v1556
        %v1653 = vmul.f32 %v1365, %v1557
        %v1654 = vmul.f32 %v1366, %v1558
        %v1655 = vmul.f32 %v1367, %v1559
        %v1656 = vmul.f32 %v1368, %v1560
        %v1657 = vmul.f32 %v1369, %v1561
        %v1658 = vmul.f32 %v1370, %v1562
        %v1659 = vld [vmem:[%s3] sm:$0xff]
        %v1660 = vld [vmem:[%s3 + $0x8] sm:$0xff]
        %v1661 = vld [vmem:[%s3 + $0x10] sm:$0xff]
        %v1662 = vld [vmem:[%s3 + $0x18] sm:$0xff]
        %v1663 = vld [vmem:[%s3 + $0x20] sm:$0xff]
        %v1664 = vld [vmem:[%s3 + $0x28] sm:$0xff]
        %v1665 = vld [vmem:[%s3 + $0x30] sm:$0xff]
        %v1666 = vld [vmem:[%s3 + $0x38] sm:$0xff]
        %v1667 = vld [vmem:[%s3 + $0x40] sm:$0xff]
        %v1668 = vld [vmem:[%s3 + $0x48] sm:$0xff]
        %v1669 = vld [vmem:[%s3 + $0x50] sm:$0xff]
        %v1670 = vld [vmem:[%s3 + $0x58] sm:$0xff]
        %v1671 = vld [vmem:[%s3 + $0x60] sm:$0xff]
        %v1672 = vld [vmem:[%s3 + $0x68] sm:$0xff]
        %v1673 = vld [vmem:[%s3 + $0x70] sm:$0xff]
        %v1674 = vld [vmem:[%s3 + $0x78] sm:$0xff]
        %v1675 = vld [vmem:[%s3 + $0x80] sm:$0xff]
        %v1676 = vld [vmem:[%s3 + $0x88] sm:$0xff]
        %v1677 = vld [vmem:[%s3 + $0x90] sm:$0xff]
        %v1678 = vld [vmem:[%s3 + $0x98] sm:$0xff]
        %v1679 = vld [vmem:[%s3 + $0xa0] sm:$0xff]
        %v1680 = vld [vmem:[%s3 + $0xa8] sm:$0xff]
        %v1681 = vld [vmem:[%s3 + $0xb0] sm:$0xff]
        %v1682 = vld [vmem:[%s3 + $0xb8] sm:$0xff]
        %v1683 = vld [vmem:[%s3 + $0xc0] sm:$0xff]
        %v1684 = vld [vmem:[%s3 + $0xc8] sm:$0xff]
        %v1685 = vld [vmem:[%s3 + $0xd0] sm:$0xff]
        %v1686 = vld [vmem:[%s3 + $0xd8] sm:$0xff]
        %v1687 = vld [vmem:[%s3 + $0xe0] sm:$0xff]
        %v1688 = vld [vmem:[%s3 + $0xe8] sm:$0xff]
        %v1689 = vld [vmem:[%s3 + $0xf0] sm:$0xff]
        %v1690 = vld [vmem:[%s3 + $0xf8] sm:$0xff]
        %v1691 = vld [vmem:[%s3 + $0x100] sm:$0xff]
        %v1692 = vld [vmem:[%s3 + $0x108] sm:$0xff]
        %v1693 = vld [vmem:[%s3 + $0x110] sm:$0xff]
        %v1694 = vld [vmem:[%s3 + $0x118] sm:$0xff]
        %v1695 = vld [vmem:[%s3 + $0x120] sm:$0xff]
        %v1696 = vld [vmem:[%s3 + $0x128] sm:$0xff]
        %v1697 = vld [vmem:[%s3 + $0x130] sm:$0xff]
        %v1698 = vld [vmem:[%s3 + $0x138] sm:$0xff]
        %v1699 = vld [vmem:[%s3 + $0x140] sm:$0xff]
        %v1700 = vld [vmem:[%s3 + $0x148] sm:$0xff]
        %v1701 = vld [vmem:[%s3 + $0x150] sm:$0xff]
        %v1702 = vld [vmem:[%s3 + $0x158] sm:$0xff]
        %v1703 = vld [vmem:[%s3 + $0x160] sm:$0xff]
        %v1704 = vld [vmem:[%s3 + $0x168] sm:$0xff]
        %v1705 = vld [vmem:[%s3 + $0x170] sm:$0xff]
        %v1706 = vld [vmem:[%s3 + $0x178] sm:$0xff]
        %v1707 = vld [vmem:[%s4] sm:$0xff]
        %v1708 = vld [vmem:[%s4 + $0x8] sm:$0xff]
        %v1709 = vld [vmem:[%s4 + $0x10] sm:$0xff]
        %v1710 = vld [vmem:[%s4 + $0x18] sm:$0xff]
        %v1711 = vld [vmem:[%s4 + $0x20] sm:$0xff]
        %v1712 = vld [vmem:[%s4 + $0x28] sm:$0xff]
        %v1713 = vld [vmem:[%s4 + $0x30] sm:$0xff]
        %v1714 = vld [vmem:[%s4 + $0x38] sm:$0xff]
        %1716 = vset.pattern.permute.xlu0 0
        %1717 = vperm.xlu0 %1716, %v1707
        %v1718 = vpop.permute.xlu0 %1717
        %1721 = vset.pattern.permute.xlu0 0
        %1722 = vperm.xlu0 %1721, %v1708
        %v1723 = vpop.permute.xlu0 %1722
        %1726 = vset.pattern.permute.xlu0 0
        %1727 = vperm.xlu0 %1726, %v1709
        %v1728 = vpop.permute.xlu0 %1727
        %1731 = vset.pattern.permute.xlu0 0
        %1732 = vperm.xlu0 %1731, %v1710
        %v1733 = vpop.permute.xlu0 %1732
        %1736 = vset.pattern.permute.xlu0 0
        %1737 = vperm.xlu0 %1736, %v1711
        %v1738 = vpop.permute.xlu0 %1737
        %1741 = vset.pattern.permute.xlu0 0
        %1742 = vperm.xlu0 %1741, %v1712
        %v1743 = vpop.permute.xlu0 %1742
        %1746 = vset.pattern.permute.xlu0 0
        %1747 = vperm.xlu0 %1746, %v1713
        %v1748 = vpop.permute.xlu0 %1747
        %1751 = vset.pattern.permute.xlu0 0
        %1752 = vperm.xlu0 %1751, %v1714
        %v1753 = vpop.permute.xlu0 %1752
        %1755 = vmatprep.subr.mxu0 0.0
        %1756 = vmatpush1.msra.mxu0 %v1563
        %1757 = vmatprep.subr.mxu0 0.0
        %1758 = vmatpush1.msra.mxu0 %v1564
        %1759 = vmatprep.subr.mxu0 0.0
        %1760 = vmatpush1.msra.mxu0 %v1565
        %1761 = vmatprep.subr.mxu0 0.0
        %1762 = vmatpush1.msra.mxu0 %v1566
        %1763 = vmatprep.subr.mxu0 0.0
        %1764 = vmatpush1.msra.mxu0 %v1567
        %1765 = vmatprep.subr.mxu0 0.0
        %1766 = vmatpush1.msra.mxu0 %v1568
        %1767 = vmatprep.subr.mxu0 0.0
        %1768 = vmatpush1.msra.mxu0 %v1569
        %1769 = vmatprep.subr.mxu0 0.0
        %1770 = vmatpush1.msra.mxu0 %v1570
        %1771 = vmatprep.subr.mxu0 0.0
        %1772 = vmatpush1.msra.mxu0 %v1571
        %1773 = vmatprep.subr.mxu0 0.0
        %1774 = vmatpush1.msra.mxu0 %v1572
        %1775 = vmatprep.subr.mxu0 0.0
        %1776 = vmatpush1.msra.mxu0 %v1573
        %1777 = vmatprep.subr.mxu0 0.0
        %1778 = vmatpush1.msra.mxu0 %v1574
        %1779 = vmatprep.subr.mxu0 0.0
        %1780 = vmatpush1.msra.mxu0 %v1575
        %1781 = vmatprep.subr.mxu0 0.0
        %1782 = vmatpush1.msra.mxu0 %v1576
        %1783 = vmatprep.subr.mxu0 0.0
        %1784 = vmatpush1.msra.mxu0 %v1577
        %1785 = vmatprep.subr.mxu0 0.0
        %1786 = vmatpush1.msra.mxu0 %v1578
        %1787 = vmatprep.subr.mxu0 0.0
        %1788 = vmatpush1.msra.mxu0 %v1579
        %1789 = vmatprep.subr.mxu0 0.0
        %1790 = vmatpush1.msra.mxu0 %v1580
        %1791 = vmatprep.subr.mxu0 0.0
        %1792 = vmatpush1.msra.mxu0 %v1581
        %1793 = vmatprep.subr.mxu0 0.0
        %1794 = vmatpush1.msra.mxu0 %v1582
        %1795 = vmatprep.subr.mxu0 0.0
        %1796 = vmatpush1.msra.mxu0 %v1583
        %1797 = vmatprep.subr.mxu0 0.0
        %1798 = vmatpush1.msra.mxu0 %v1584
        %1799 = vmatprep.subr.mxu0 0.0
        %1800 = vmatpush1.msra.mxu0 %v1585
        %1801 = vmatprep.subr.mxu0 0.0
        %1802 = vmatpush1.msra.mxu0 %v1586
        %1803 = vmatprep.subr.mxu0 0.0
        %1804 = vmatpush1.msra.mxu0 %v1587
        %1805 = vmatprep.subr.mxu0 0.0
        %1806 = vmatpush1.msra.mxu0 %v1588
        %1807 = vmatprep.subr.mxu0 0.0
        %1808 = vmatpush1.msra.mxu0 %v1589
        %1809 = vmatprep.subr.mxu0 0.0
        %1810 = vmatpush1.msra.mxu0 %v1590
        %1811 = vmatprep.subr.mxu0 0.0
        %1812 = vmatpush1.msra.mxu0 %v1591
        %1813 = vmatprep.subr.mxu0 0.0
        %1814 = vmatpush1.msra.mxu0 %v1592
        %1815 = vmatprep.subr.mxu0 0.0
        %1816 = vmatpush1.msra.mxu0 %v1593
        %1817 = vmatprep.subr.mxu0 0.0
        %1818 = vmatpush1.msra.mxu0 %v1594
        %1819 = vmatprep.mubr.f32.mxu0 %v1660
        %1820 = vmatmul.mubr.f32.gmra.mrb[0].mxu0 %v1659
        %v1821 = vpop.f32.mrb[0].mxu0
        %v1822 = vadd.f32 %v1718, %v1821
        %v1823 = vpop.f32.mrb[0].mxu0
        %1824 = vmatprep.mubr.f32.mxu0 %v1666
        %1825 = vmatmul.mubr.f32.gmra.mrb[0].mxu0 %v1665
        %v1826 = vpop.f32.mrb[0].mxu0
        %v1827 = vadd.f32 %v1723, %v1826
        %v1828 = vpop.f32.mrb[0].mxu0
        %1829 = vmatprep.mubr.f32.mxu0 %v1672
        %1830 = vmatmul.mubr.f32.gmra.mrb[0].mxu0 %v1671
        %v1831 = vpop.f32.mrb[0].mxu0
        %v1832 = vadd.f32 %v1728, %v1831
        %v1833 = vpop.f32.mrb[0].mxu0
        %1834 = vmatprep.mubr.f32.mxu0 %v1678
        %1835 = vmatmul.mubr.f32.gmra.mrb[0].mxu0 %v1677
        %v1836 = vpop.f32.mrb[0].mxu0
        %v1837 = vadd.f32 %v1733, %v1836
        %v1838 = vpop.f32.mrb[0].mxu0
        %1839 = vmatprep.mubr.f32.mxu0 %v1684
        %1840 = vmatmul.mubr.f32.gmra.mrb[0].mxu0 %v1683
        %v1841 = vpop.f32.mrb[0].mxu0
        %v1842 = vadd.f32 %v1738, %v1841
        %v1843 = vpop.f32.mrb[0].mxu0
        %1844 = vmatprep.mubr.f32.mxu0 %v1690
        %1845 = vmatmul.mubr.f32.gmra.mrb[0].mxu0 %v1689
        %v1846 = vpop.f32.mrb[0].mxu0
        %v1847 = vadd.f32 %v1743, %v1846
        %v1848 = vpop.f32.mrb[0].mxu0
        %1849 = vmatprep.mubr.f32.mxu0 %v1696
        %1850 = vmatmul.mubr.f32.gmra.mrb[0].mxu0 %v1695
        %v1851 = vpop.f32.mrb[0].mxu0
        %v1852 = vadd.f32 %v1748, %v1851
        %v1853 = vpop.f32.mrb[0].mxu0
        %1854 = vmatprep.mubr.f32.mxu0 %v1702
        %1855 = vmatmul.mubr.f32.gmra.mrb[0].mxu0 %v1701
        %v1856 = vpop.f32.mrb[0].mxu0
        %v1857 = vadd.f32 %v1753, %v1856
        %v1858 = vpop.f32.mrb[0].mxu0
        %1859 = vdwg.mxu0
        %1860 = vmatprep.subr.mxu0 0.0
        %1861 = vmatpush1.msra.mxu0 %v1595
        %1862 = vmatprep.subr.mxu0 0.0
        %1863 = vmatpush1.msra.mxu0 %v1596
        %1864 = vmatprep.subr.mxu0 0.0
        %1865 = vmatpush1.msra.mxu0 %v1597
        %1866 = vmatprep.subr.mxu0 0.0
        %1867 = vmatpush1.msra.mxu0 %v1598
        %1868 = vmatprep.subr.mxu0 0.0
        %1869 = vmatpush1.msra.mxu0 %v1599
        %1870 = vmatprep.subr.mxu0 0.0
        %1871 = vmatpush1.msra.mxu0 %v1600
        %1872 = vmatprep.subr.mxu0 0.0
        %1873 = vmatpush1.msra.mxu0 %v1601
        %1874 = vmatprep.subr.mxu0 0.0
        %1875 = vmatpush1.msra.mxu0 %v1602
        %1876 = vmatprep.subr.mxu0 0.0
        %1877 = vmatpush1.msra.mxu0 %v1603
        %1878 = vmatprep.subr.mxu0 0.0
        %1879 = vmatpush1.msra.mxu0 %v1604
        %1880 = vmatprep.subr.mxu0 0.0
        %1881 = vmatpush1.msra.mxu0 %v1605
        %1882 = vmatprep.subr.mxu0 0.0
        %1883 = vmatpush1.msra.mxu0 %v1606
        %1884 = vmatprep.subr.mxu0 0.0
        %1885 = vmatpush1.msra.mxu0 %v1607
        %1886 = vmatprep.subr.mxu0 0.0
        %1887 = vmatpush1.msra.mxu0 %v1608
        %1888 = vmatprep.subr.mxu0 0.0
        %1889 = vmatpush1.msra.mxu0 %v1609
        %1890 = vmatprep.subr.mxu0 0.0
        %1891 = vmatpush1.msra.mxu0 %v1610
        %1892 = vmatprep.subr.mxu0 0.0
        %1893 = vmatpush1.msra.mxu0 %v1611
        %1894 = vmatprep.subr.mxu0 0.0
        %1895 = vmatpush1.msra.mxu0 %v1612
        %1896 = vmatprep.subr.mxu0 0.0
        %1897 = vmatpush1.msra.mxu0 %v1613
        %1898 = vmatprep.subr.mxu0 0.0
        %1899 = vmatpush1.msra.mxu0 %v1614
        %1900 = vmatprep.subr.mxu0 0.0
        %1901 = vmatpush1.msra.mxu0 %v1615
        %1902 = vmatprep.subr.mxu0 0.0
        %1903 = vmatpush1.msra.mxu0 %v1616
        %1904 = vmatprep.subr.mxu0 0.0
        %1905 = vmatpush1.msra.mxu0 %v1617
        %1906 = vmatprep.subr.mxu0 0.0
        %1907 = vmatpush1.msra.mxu0 %v1618
        %1908 = vmatprep.subr.mxu0 0.0
        %1909 = vmatpush1.msra.mxu0 %v1619
        %1910 = vmatprep.subr.mxu0 0.0
        %1911 = vmatpush1.msra.mxu0 %v1620
        %1912 = vmatprep.subr.mxu0 0.0
        %1913 = vmatpush1.msra.mxu0 %v1621
        %1914 = vmatprep.subr.mxu0 0.0
        %1915 = vmatpush1.msra.mxu0 %v1622
        %1916 = vmatprep.subr.mxu0 0.0
        %1917 = vmatpush1.msra.mxu0 %v1623
        %1918 = vmatprep.subr.mxu0 0.0
        %1919 = vmatpush1.msra.mxu0 %v1624
        %1920 = vmatprep.subr.mxu0 0.0
        %1921 = vmatpush1.msra.mxu0 %v1625
        %1922 = vmatprep.subr.mxu0 0.0
        %1923 = vmatpush1.msra.mxu0 %v1626
        %1924 = vmatprep.mubr.f32.mxu0 %v1662
        %1925 = vmatmul.mubr.f32.gmra.mrb[0].mxu0 %v1661
        %v1926 = vpop.f32.mrb[0].mxu0
        %v1927 = vadd.f32 %v1822, %v1926
        %v1928 = vpop.f32.mrb[0].mxu0
        %1929 = vmatprep.mubr.f32.mxu0 %v1668
        %1930 = vmatmul.mubr.f32.gmra.mrb[0].mxu0 %v1667
        %v1931 = vpop.f32.mrb[0].mxu0
        %v1932 = vadd.f32 %v1827, %v1931
        %v1933 = vpop.f32.mrb[0].mxu0
        %1934 = vmatprep.mubr.f32.mxu0 %v1674
        %1935 = vmatmul.mubr.f32.gmra.mrb[0].mxu0 %v1673
        %v1936 = vpop.f32.mrb[0].mxu0
        %v1937 = vadd.f32 %v1832, %v1936
        %v1938 = vpop.f32.mrb[0].mxu0
        %1939 = vmatprep.mubr.f32.mxu0 %v1680
        %1940 = vmatmul.mubr.f32.gmra.mrb[0].mxu0 %v1679
        %v1941 = vpop.f32.mrb[0].mxu0
        %v1942 = vadd.f32 %v1837, %v1941
        %v1943 = vpop.f32.mrb[0].mxu0
        %1944 = vmatprep.mubr.f32.mxu0 %v1686
        %1945 = vmatmul.mubr.f32.gmra.mrb[0].mxu0 %v1685
        %v1946 = vpop.f32.mrb[0].mxu0
        %v1947 = vadd.f32 %v1842, %v1946
        %v1948 = vpop.f32.mrb[0].mxu0
        %1949 = vmatprep.mubr.f32.mxu0 %v1692
        %1950 = vmatmul.mubr.f32.gmra.mrb[0].mxu0 %v1691
        %v1951 = vpop.f32.mrb[0].mxu0
        %v1952 = vadd.f32 %v1847, %v1951
        %v1953 = vpop.f32.mrb[0].mxu0
        %1954 = vmatprep.mubr.f32.mxu0 %v1698
        %1955 = vmatmul.mubr.f32.gmra.mrb[0].mxu0 %v1697
        %v1956 = vpop.f32.mrb[0].mxu0
        %v1957 = vadd.f32 %v1852, %v1956
        %v1958 = vpop.f32.mrb[0].mxu0
        %1959 = vmatprep.mubr.f32.mxu0 %v1704
        %1960 = vmatmul.mubr.f32.gmra.mrb[0].mxu0 %v1703
        %v1961 = vpop.f32.mrb[0].mxu0
        %v1962 = vadd.f32 %v1857, %v1961
        %v1963 = vpop.f32.mrb[0].mxu0
        %1964 = vdwg.mxu0
        %1965 = vmatprep.subr.mxu0 0.0
        %1966 = vmatpush1.msra.mxu0 %v1627
        %1967 = vmatprep.subr.mxu0 0.0
        %1968 = vmatpush1.msra.mxu0 %v1628
        %1969 = vmatprep.subr.mxu0 0.0
        %1970 = vmatpush1.msra.mxu0 %v1629
        %1971 = vmatprep.subr.mxu0 0.0
        %1972 = vmatpush1.msra.mxu0 %v1630
        %1973 = vmatprep.subr.mxu0 0.0
        %1974 = vmatpush1.msra.mxu0 %v1631
        %1975 = vmatprep.subr.mxu0 0.0
        %1976 = vmatpush1.msra.mxu0 %v1632
        %1977 = vmatprep.subr.mxu0 0.0
        %1978 = vmatpush1.msra.mxu0 %v1633
        %1979 = vmatprep.subr.mxu0 0.0
        %1980 = vmatpush1.msra.mxu0 %v1634
        %1981 = vmatprep.subr.mxu0 0.0
        %1982 = vmatpush1.msra.mxu0 %v1635
        %1983 = vmatprep.subr.mxu0 0.0
        %1984 = vmatpush1.msra.mxu0 %v1636
        %1985 = vmatprep.subr.mxu0 0.0
        %1986 = vmatpush1.msra.mxu0 %v1637
        %1987 = vmatprep.subr.mxu0 0.0
        %1988 = vmatpush1.msra.mxu0 %v1638
        %1989 = vmatprep.subr.mxu0 0.0
        %1990 = vmatpush1.msra.mxu0 %v1639
        %1991 = vmatprep.subr.mxu0 0.0
        %1992 = vmatpush1.msra.mxu0 %v1640
        %1993 = vmatprep.subr.mxu0 0.0
        %1994 = vmatpush1.msra.mxu0 %v1641
        %1995 = vmatprep.subr.mxu0 0.0
        %1996 = vmatpush1.msra.mxu0 %v1642
        %1997 = vmatprep.subr.mxu0 0.0
        %1998 = vmatpush1.msra.mxu0 %v1643
        %1999 = vmatprep.subr.mxu0 0.0
        %2000 = vmatpush1.msra.mxu0 %v1644
        %2001 = vmatprep.subr.mxu0 0.0
        %2002 = vmatpush1.msra.mxu0 %v1645
        %2003 = vmatprep.subr.mxu0 0.0
        %2004 = vmatpush1.msra.mxu0 %v1646
        %2005 = vmatprep.subr.mxu0 0.0
        %2006 = vmatpush1.msra.mxu0 %v1647
        %2007 = vmatprep.subr.mxu0 0.0
        %2008 = vmatpush1.msra.mxu0 %v1648
        %2009 = vmatprep.subr.mxu0 0.0
        %2010 = vmatpush1.msra.mxu0 %v1649
        %2011 = vmatprep.subr.mxu0 0.0
        %2012 = vmatpush1.msra.mxu0 %v1650
        %2013 = vmatprep.subr.mxu0 0.0
        %2014 = vmatpush1.msra.mxu0 %v1651
        %2015 = vmatprep.subr.mxu0 0.0
        %2016 = vmatpush1.msra.mxu0 %v1652
        %2017 = vmatprep.subr.mxu0 0.0
        %2018 = vmatpush1.msra.mxu0 %v1653
        %2019 = vmatprep.subr.mxu0 0.0
        %2020 = vmatpush1.msra.mxu0 %v1654
        %2021 = vmatprep.subr.mxu0 0.0
        %2022 = vmatpush1.msra.mxu0 %v1655
        %2023 = vmatprep.subr.mxu0 0.0
        %2024 = vmatpush1.msra.mxu0 %v1656
        %2025 = vmatprep.subr.mxu0 0.0
        %2026 = vmatpush1.msra.mxu0 %v1657
        %2027 = vmatprep.subr.mxu0 0.0
        %2028 = vmatpush1.msra.mxu0 %v1658
        %2029 = vmatprep.mubr.f32.mxu0 %v1664
        %2030 = vmatmul.mubr.f32.gmra.mrb[0].mxu0 %v1663
        %v2031 = vpop.f32.mrb[0].mxu0
        %v2032 = vadd.f32 %v1927, %v2031
        %v2033 = vpop.f32.mrb[0].mxu0
        %2034 = vmatprep.mubr.f32.mxu0 %v1670
        %2035 = vmatmul.mubr.f32.gmra.mrb[0].mxu0 %v1669
        %v2036 = vpop.f32.mrb[0].mxu0
        %v2037 = vadd.f32 %v1932, %v2036
        %v2038 = vpop.f32.mrb[0].mxu0
        %2039 = vmatprep.mubr.f32.mxu0 %v1676
        %2040 = vmatmul.mubr.f32.gmra.mrb[0].mxu0 %v1675
        %v2041 = vpop.f32.mrb[0].mxu0
        %v2042 = vadd.f32 %v1937, %v2041
        %v2043 = vpop.f32.mrb[0].mxu0
        %2044 = vmatprep.mubr.f32.mxu0 %v1682
        %2045 = vmatmul.mubr.f32.gmra.mrb[0].mxu0 %v1681
        %v2046 = vpop.f32.mrb[0].mxu0
        %v2047 = vadd.f32 %v1942, %v2046
        %v2048 = vpop.f32.mrb[0].mxu0
        %2049 = vmatprep.mubr.f32.mxu0 %v1688
        %2050 = vmatmul.mubr.f32.gmra.mrb[0].mxu0 %v1687
        %v2051 = vpop.f32.mrb[0].mxu0
        %v2052 = vadd.f32 %v1947, %v2051
        %v2053 = vpop.f32.mrb[0].mxu0
        %2054 = vmatprep.mubr.f32.mxu0 %v1694
        %2055 = vmatmul.mubr.f32.gmra.mrb[0].mxu0 %v1693
        %v2056 = vpop.f32.mrb[0].mxu0
        %v2057 = vadd.f32 %v1952, %v2056
        %v2058 = vpop.f32.mrb[0].mxu0
        %2059 = vmatprep.mubr.f32.mxu0 %v1700
        %2060 = vmatmul.mubr.f32.gmra.mrb[0].mxu0 %v1699
        %v2061 = vpop.f32.mrb[0].mxu0
        %v2062 = vadd.f32 %v1957, %v2061
        %v2063 = vpop.f32.mrb[0].mxu0
        %2064 = vmatprep.mubr.f32.mxu0 %v1706
        %2065 = vmatmul.mubr.f32.gmra.mrb[0].mxu0 %v1705
        %v2066 = vpop.f32.mrb[0].mxu0
        %v2067 = vadd.f32 %v1962, %v2066
        %v2068 = vpop.f32.mrb[0].mxu0
        %2069 = vdwg.mxu0
        %v2070 = vmax.f32 %v2032, 0.0
        %v2071 = vmax.f32 %v2037, 0.0
        %v2072 = vmax.f32 %v2042, 0.0
        %v2073 = vmax.f32 %v2047, 0.0
        %v2074 = vmax.f32 %v2052, 0.0
        %v2075 = vmax.f32 %v2057, 0.0
        %v2076 = vmax.f32 %v2062, 0.0
        %v2077 = vmax.f32 %v2067, 0.0
        %v2078 = vld [vmem:[%s5] sm:$0xff]
        %v2079 = vld [vmem:[%s5 + $0x8] sm:$0xff]
        %v2080 = vld [vmem:[%s5 + $0x10] sm:$0xff]
        %v2081 = vld [vmem:[%s5 + $0x18] sm:$0xff]
        %v2082 = vld [vmem:[%s6] sm:$0xff]
        %v2083 = vld [vmem:[%s6 + $0x8] sm:$0xff]
        %v2084 = vld [vmem:[%s6 + $0x10] sm:$0xff]
        %v2085 = vld [vmem:[%s6 + $0x18] sm:$0xff]
        %2087 = vset.pattern.permute.xlu0 0
        %2088 = vperm.xlu0 %2087, %v2082
        %v2089 = vpop.permute.xlu0 %2088
        %2092 = vset.pattern.permute.xlu0 0
        %2093 = vperm.xlu0 %2092, %v2083
        %v2094 = vpop.permute.xlu0 %2093
        %2097 = vset.pattern.permute.xlu0 0
        %2098 = vperm.xlu0 %2097, %v2084
        %v2099 = vpop.permute.xlu0 %2098
        %2102 = vset.pattern.permute.xlu0 0
        %2103 = vperm.xlu0 %2102, %v2085
        %v2104 = vpop.permute.xlu0 %2103
        %vm2106 = vcmask 523264
        %v2108 = vsel %vm2106, %v2078, 0
        %v2111 = vsel %vm2106, %v2079, 0
        %v2114 = vsel %vm2106, %v2080, 0
        %v2117 = vsel %vm2106, %v2081, 0
        %2119 = vmatprep.subr.mxu0 0.0
        %2120 = vmatpush1.msra.mxu0 %v2070
        %2121 = vmatprep.subr.mxu0 0.0
        %2122 = vmatpush1.msra.mxu0 %v2071
        %2123 = vmatprep.subr.mxu0 0.0
        %2124 = vmatpush1.msra.mxu0 %v2072
        %2125 = vmatprep.subr.mxu0 0.0
        %2126 = vmatpush1.msra.mxu0 %v2073
        %2127 = vmatprep.subr.mxu0 0.0
        %2128 = vmatpush1.msra.mxu0 %v2074
        %2129 = vmatprep.subr.mxu0 0.0
        %2130 = vmatpush1.msra.mxu0 %v2075
        %2131 = vmatprep.subr.mxu0 0.0
        %2132 = vmatpush1.msra.mxu0 %v2076
        %2133 = vmatprep.subr.mxu0 0.0
        %2134 = vmatpush1.msra.mxu0 %v2077
        %2135 = vmatprep.subr.mxu0 0.0
        %2136 = vmatpush1.msra.mxu0 0.0
        %2137 = vmatprep.subr.mxu0 0.0
        %2138 = vmatpush1.msra.mxu0 0.0
        %2139 = vmatprep.subr.mxu0 0.0
        %2140 = vmatpush1.msra.mxu0 0.0
        %2141 = vmatprep.subr.mxu0 0.0
        %2142 = vmatpush1.msra.mxu0 0.0
        %2143 = vmatprep.subr.mxu0 0.0
        %2144 = vmatpush1.msra.mxu0 0.0
        %2145 = vmatprep.subr.mxu0 0.0
        %2146 = vmatpush1.msra.mxu0 0.0
        %2147 = vmatprep.subr.mxu0 0.0
        %2148 = vmatpush1.msra.mxu0 0.0
        %2149 = vmatprep.subr.mxu0 0.0
        %2150 = vmatpush1.msra.mxu0 0.0
        %2151 = vmatprep.subr.mxu0 0.0
        %2152 = vmatpush1.msra.mxu0 0.0
        %2153 = vmatprep.subr.mxu0 0.0
        %2154 = vmatpush1.msra.mxu0 0.0
        %2155 = vmatprep.subr.mxu0 0.0
        %2156 = vmatpush1.msra.mxu0 0.0
        %2157 = vmatprep.subr.mxu0 0.0
        %2158 = vmatpush1.msra.mxu0 0.0
        %2159 = vmatprep.subr.mxu0 0.0
        %2160 = vmatpush1.msra.mxu0 0.0
        %2161 = vmatprep.subr.mxu0 0.0
        %2162 = vmatpush1.msra.mxu0 0.0
        %2163 = vmatprep.subr.mxu0 0.0
        %2164 = vmatpush1.msra.mxu0 0.0
        %2165 = vmatprep.subr.mxu0 0.0
        %2166 = vmatpush1.msra.mxu0 0.0
        %2167 = vmatprep.subr.mxu0 0.0
        %2168 = vmatpush1.msra.mxu0 0.0
        %2169 = vmatprep.subr.mxu0 0.0
        %2170 = vmatpush1.msra.mxu0 0.0
        %2171 = vmatprep.subr.mxu0 0.0
        %2172 = vmatpush1.msra.mxu0 0.0
        %2173 = vmatprep.subr.mxu0 0.0
        %2174 = vmatpush1.msra.mxu0 0.0
        %2175 = vmatprep.subr.mxu0 0.0
        %2176 = vmatpush1.msra.mxu0 0.0
        %2177 = vmatprep.subr.mxu0 0.0
        %2178 = vmatpush1.msra.mxu0 0.0
        %2179 = vmatprep.subr.mxu0 0.0
        %2180 = vmatpush1.msra.mxu0 0.0
        %2181 = vmatprep.subr.mxu0 0.0
        %2182 = vmatpush1.msra.mxu0 0.0
        %2183 = vmatprep.mubr.f32.mxu0 0.0
        %2184 = vmatmul.mubr.f32.gmra.mrb[0].mxu0 %v2108
        %v2185 = vpop.f32.mrb[0].mxu0
        %v2186 = vadd.f32 %v2089, %v2185
        %v2187 = vpop.f32.mrb[0].mxu0
        %2188 = vmatprep.mubr.f32.mxu0 0.0
        %2189 = vmatmul.mubr.f32.gmra.mrb[0].mxu0 %v2111
        %v2190 = vpop.f32.mrb[0].mxu0
        %v2191 = vadd.f32 %v2094, %v2190
        %v2192 = vpop.f32.mrb[0].mxu0
        %2193 = vmatprep.mubr.f32.mxu0 0.0
        %2194 = vmatmul.mubr.f32.gmra.mrb[0].mxu0 %v2114
        %v2195 = vpop.f32.mrb[0].mxu0
        %v2196 = vadd.f32 %v2099, %v2195
        %v2197 = vpop.f32.mrb[0].mxu0
        %2198 = vmatprep.mubr.f32.mxu0 0.0
        %2199 = vmatmul.mubr.f32.gmra.mrb[0].mxu0 %v2117
        %v2200 = vpop.f32.mrb[0].mxu0
        %v2201 = vadd.f32 %v2104, %v2200
        %v2202 = vpop.f32.mrb[0].mxu0
        %2203 = vdwg.mxu0
        %v2204 = vmax.f32 %v2186, 0.0
        %v2205 = vmax.f32 %v2191, 0.0
        %v2206 = vmax.f32 %v2196, 0.0
        %v2207 = vmax.f32 %v2201, 0.0
        %v2208 = vld [vmem:[%s7] sm:$0xff]
        %v2209 = vld [vmem:[%s7 + $0x8] sm:$0xff]
        %v2210 = vld [vmem:[%s7 + $0x10] sm:$0xff]
        %v2211 = vld [vmem:[%s7 + $0x18] sm:$0xff]
        %2213 = vset.pattern.permute.xlu0 0
        %2214 = vperm.xlu0 %2213, %v2208
        %v2215 = vpop.permute.xlu0 %2214
        %2218 = vset.pattern.permute.xlu0 0
        %2219 = vperm.xlu0 %2218, %v2209
        %v2220 = vpop.permute.xlu0 %2219
        %2223 = vset.pattern.permute.xlu0 0
        %2224 = vperm.xlu0 %2223, %v2210
        %v2225 = vpop.permute.xlu0 %2224
        %2228 = vset.pattern.permute.xlu0 0
        %2229 = vperm.xlu0 %2228, %v2211
        %v2230 = vpop.permute.xlu0 %2229
        %v2232 = vmul.f32 %v2204, %v2215
        %v2233 = vmul.f32 %v2205, %v2220
        %v2234 = vmul.f32 %v2206, %v2225
        %v2235 = vmul.f32 %v2207, %v2230
        %v2236 = vadd.f32 %v2232, %v2233
        %v2237 = vadd.f32 %v2236, %v2234
        %v2238 = vadd.f32 %v2237, %v2235
        %v2239 = vrot.slane %v2238, 4
        %v2240 = vadd.f32 %v2238, %v2239
        %v2241 = vrot.slane %v2240, 2
        %v2242 = vadd.f32 %v2240, %v2241
        %v2243 = vrot.slane %v2242, 1
        %v2244 = vadd.f32 %v2242, %v2243
        %v2245 = vld [vmem:[%s1178] sm:$0x1]
        %v2246 = vadd.f32 %v2244, %v2245
        %v2247 = vxor.u32 %v2246, 2147483648
        %v2248 = vmul.f32 %v2247, 1.442695
        %v2249 = vpow.pop %v2248
        %v2250 = vadd.f32 %v2249, 1.0
        %v2251 = vrcp.pop %v2250
        %v2252 = vmul.f32 1.0, %v2251
        %2253 = vst [vmem:[%s1175] sm:$0x1] %v2252
        %s2254 = sand.u32 %s213, 1
        %s2255 = scalar_lea.sflag [#allocation5], %s2254
        %s2256 = sand.u32 %s213, 1
        %s2257 = scalar_lea.vmem [#allocation4], %s2256
        // Predicated region
        $region135: #{forward.1} parent=125 // pred_check
          %p2258 = pneg %p223
        $region136: #{forward.1} parent=125 // pred_check_branch
          %2260 = sbr.rel (%p2258) target = $region138
        $region137: #{forward.1} parent=125 // pred_region
          %s2262 = ssub.s32 16, 16
          %2263 = vsyncadd %s2255, %s2262
          %s2264 = smul.addr %s22, 16
          %s2265 = scalar_lea.hbm %s8, %s2264
          %s2267 = sshll.u32 %s2257, 4
          %s2268 = int_to_ptr.vmem [resolvable:$true] %s2267
          %2270 = dma.vmem_to_hbm [thread:$0]  %s2268, 16, %s2265, %s2255
        $region138: #{forward.1} parent=125 // pred_fallthru
          _
      $region126: #{forward.1} parent=5 // pred_fallthru
        _
      %p2271 = scmp.le.s32.totalorder 2, %s17
      // Predicated region
      $region139: #{forward.1} parent=5 // pred_check
        %p2272 = pneg %p2271
      $region140: #{forward.1} parent=5 // pred_check_branch
        %2274 = sbr.rel (%p2272) target = $region142
      $region141: #{forward.1} parent=5 // pred_region
        %s2275 = ssub.s32 %s17, 2
        // Predicated region
        $region143: #{forward.1} parent=141 // pred_check
          %p2276 = pneg %p229
        $region144: #{forward.1} parent=141 // pred_check_branch
          %2278 = sbr.rel (%p2276) target = $region146
        $region145: #{forward.1} parent=141 // pred_region
          %s2279 = sand.u32 %s214, 1
          %s2280 = scalar_lea.sflag [#allocation5], %s2279
          %s2281 = sand.u32 %s214, 1
          %s2282 = scalar_lea.vmem [#allocation4], %s2281
          %2283 = dma.done %s2280, 16
        $region146: #{forward.1} parent=141 // pred_fallthru
          _
      $region142: #{forward.1} parent=5 // pred_fallthru
        _
    $region6: #{forward.1} parent=1 // loop_footer
      %s21 = sadd.s32 1, %s17
    $region7: #{forward.1} parent=1 // loop_footer_branch
      %16 = sbr.rel target = $region3
    $region8: #{forward.1} parent=1 // loop_exit
      _
    %2284 = vsyncpa [#allocation5], 1
    %s2285 = scalar_lea.sflag [#allocation5], 1
    %2286 = vsyncpa %s2285, 1

</llo_original>
